<compile_context>
chip_gen: v7x
topology: tpu7x:2x2x1
jax: 0.10.0
libtpu: 0.0.40
codegen_flags: <defaults>
</compile_context>

<pallas_src>
import jax
import jax.numpy as jnp
from jax.experimental import pallas as pl
from jax.experimental.pallas import tpu as pltpu

# ---------------- model dimensions ----------------
D_SELF = 64           # self_info feature dim
T_REC = 8             # record sequence length
D_REC = 32            # record feature dim
D_GLOB = 16           # global_info feature dim
D_REC_FLAT = T_REC * D_REC            # 256

H_SELF = 128          # SelfInfoEncoder.out_dim (synthetic)
H_REC = 64            # RecordEncoder.out_dim   (synthetic)
H_GLOB = 32           # GlobalInfoEncoder.out_dim (synthetic)

H_HEAD = 256
PRED_DIM = (1 + 34) * 3               # = 105

H_CAT = H_SELF + H_REC + H_GLOB       # 224
H_CAT_PAD = 256                        # lane-dense concat width
OUT_PAD = 128                          # lane-dense output width


# ---------------- kernel ----------------
def tenpai_kernel(si_ref, rec_ref, gi_ref,
                  ws_ref, wr_ref, wg_ref, benc_ref,
                  w1_ref, b1_ref, w2_ref, b2_ref,
                  out_ref):
    f32 = jnp.float32
    cdt = ws_ref.dtype                      # compute dtype (bf16 or f32)

    # activations cast in-kernel (VPU) -> no separate XLA cast pass over HBM
    si = si_ref[...].astype(cdt)            # (TB, 64)
    rec = rec_ref[...].astype(cdt)          # (TB, 256)  (mean-pool folded in W)
    gi = gi_ref[...].astype(cdt)            # (TB, 16)

    # fused block-diagonal encoders: three accumulating MXU dots -> (TB, 256)
    h = jnp.dot(si, ws_ref[...], preferred_element_type=f32)
    h = h + jnp.dot(rec, wr_ref[...], preferred_element_type=f32)
    h = h + jnp.dot(gi, wg_ref[...], preferred_element_type=f32)
    h = jnp.maximum(h + benc_ref[...], 0.0).astype(cdt)        # relu(concat)

    # head layer 1 (single K=256 matmul replaces three concat-split matmuls)
    h1 = jnp.dot(h, w1_ref[...], preferred_element_type=f32)
    h1 = jnp.maximum(h1 + b1_ref[...], 0.0).astype(cdt)        # (TB, 256)

    # head layer 2, output padded to 128 lanes -> unmasked full-vreg stores
    out = jnp.dot(h1, w2_ref[...], preferred_element_type=f32) + b2_ref[...]
    out_ref[...] = out.astype(out_ref.dtype)                   # (TB, 128)


# ---------------- parameters ----------------
def init_params(key):
    """Deterministic synthetic parameter init (Kaiming-ish scaling)."""
    def dense(k, fan_in, fan_out):
        kw, kb = jax.random.split(k)
        w = jax.random.normal(kw, (fan_in, fan_out), jnp.float32) / jnp.sqrt(
            jnp.float32(fan_in))
        b = 0.1 * jax.random.normal(kb, (fan_out,), jnp.float32)
        return w, b

    ks = jax.random.split(key, 5)
    ws, bs = dense(ks[0], D_SELF, H_SELF)
    wr, br = dense(ks[1], D_REC, H_REC)
    wg, bg = dense(ks[2], D_GLOB, H_GLOB)
    w1, b1 = dense(ks[3], H_CAT, H_HEAD)
    w2, b2 = dense(ks[4], H_HEAD, PRED_DIM)
    return dict(ws=ws, bs=bs, wr=wr, br=br, wg=wg, bg=bg,
                w1=w1, b1=b1, w2=w2, b2=b2)


def pack_params(p, compute_dtype=jnp.bfloat16):
    """Fuse/pad per-layer params into the kernel's lane-dense layout.

    The three encoder weights are the row-slices of a block-diagonal
    (336, 256) matrix; the record mean-pool (1/T) is folded into the tiled
    record weight so the flattened (B, 256) record feeds the MXU directly.
    """
    # self encoder rows: columns [0, 128)
    ws_p = jnp.zeros((D_SELF, H_CAT_PAD), jnp.float32)
    ws_p = ws_p.at[:, 0:H_SELF].set(p["ws"])

    # record encoder rows: mean over T folded in -> tile(wr, (T,1)) / T
    wr_tiled = jnp.tile(p["wr"], (T_REC, 1)) / jnp.float32(T_REC)   # (256, 64)
    wr_p = jnp.zeros((D_REC_FLAT, H_CAT_PAD), jnp.float32)
    wr_p = wr_p.at[:, H_SELF:H_SELF + H_REC].set(wr_tiled)

    # global encoder rows: columns [192, 224)
    wg_p = jnp.zeros((D_GLOB, H_CAT_PAD), jnp.float32)
    wg_p = wg_p.at[:, H_SELF + H_REC:H_CAT].set(p["wg"])

    benc = jnp.zeros((1, H_CAT_PAD), jnp.float32)
    benc = benc.at[0, 0:H_SELF].set(p["bs"])
    benc = benc.at[0, H_SELF:H_SELF + H_REC].set(p["br"])
    benc = benc.at[0, H_SELF + H_REC:H_CAT].set(p["bg"])

    # head layer 1: pad the concat axis 224 -> 256 with zero rows
    w1 = jnp.zeros((H_CAT_PAD, H_HEAD), jnp.float32).at[0:H_CAT].set(p["w1"])
    b1 = p["b1"].reshape(1, H_HEAD)

    # head layer 2: pad the output 105 -> 128 with zero columns
    w2 = jnp.zeros((H_HEAD, OUT_PAD), jnp.float32).at[:, 0:PRED_DIM].set(p["w2"])
    b2 = jnp.zeros((1, OUT_PAD), jnp.float32).at[0, 0:PRED_DIM].set(p["b2"])

    # weights in compute dtype (bf16 halves HBM traffic & doubles MXU rate on
    # v6e/v7x); biases stay f32 — added to the f32 accumulator in-kernel.
    return (ws_p.astype(compute_dtype), wr_p.astype(compute_dtype),
            wg_p.astype(compute_dtype), benc,
            w1.astype(compute_dtype), b1,
            w2.astype(compute_dtype), b2)


# ---------------- helpers ----------------
def _round_up(x, m):
    return ((x + m - 1) // m) * m


def _spec(shape, index_map, buffer_count=None):
    """BlockSpec, requesting pipeline depth when the API supports it."""
    if buffer_count is not None:
        try:
            return pl.BlockSpec(shape, index_map,
                                pipeline_mode=pl.Buffered(buffer_count))
        except TypeError:
            pass
    return pl.BlockSpec(shape, index_map)


# ---------------- wrapper ----------------
def tenpai_pred(self_info, record, global_info, packed, *,
                tb=2048, out_dtype=jnp.float32, slice_output=True):
    """Pallas forward pass.

    Inputs may be f32 or bf16; the in-kernel cast handles either.
    slice_output=False returns the lane-dense (B, 128) slab (cheaper: avoids a
    lane-sparse post-kernel copy); columns [105:128) are exactly zero.
    """
    B = self_info.shape[0]
    ws_p, wr_p, wg_p, benc, w1, b1, w2, b2 = packed

    # free metadata reshape (contiguous row-major flatten) — no HBM pass
    record_flat = record.reshape(B, D_REC_FLAT)

    # batch tile: >=2 grid steps (v7x dual-TC via "parallel"), multiple of 16
    tb = min(tb, _round_up(pl.cdiv(B, 2), 16))
    tb = max(tb, 8)
    grid = (pl.cdiv(B, tb),)

    act_map = lambda i: (i, 0)
    res_map = lambda i: (0, 0)        # constant block -> VMEM-resident weights

    in_itemsize = jnp.dtype(self_info.dtype).itemsize
    weight_bytes = sum(int(a.size) * jnp.dtype(a.dtype).itemsize for a in packed)
    cost = pl.CostEstimate(
        flops=2 * B * (D_SELF * H_CAT_PAD + D_REC_FLAT * H_CAT_PAD
                       + D_GLOB * H_CAT_PAD + H_CAT_PAD * H_HEAD
                       + H_HEAD * OUT_PAD),
        transcendentals=0,
        bytes_accessed=B * ((D_SELF + D_REC_FLAT + D_GLOB) * in_itemsize
                            + OUT_PAD * jnp.dtype(out_dtype).itemsize)
        + weight_bytes,
    )

    out = pl.pallas_call(
        tenpai_kernel,
        out_shape=jax.ShapeDtypeStruct((B, OUT_PAD), out_dtype),
        grid=grid,
        in_specs=[
            _spec((tb, D_SELF), act_map),                 # self_info tile
            _spec((tb, D_REC_FLAT), act_map),             # record (flattened)
            _spec((tb, D_GLOB), act_map),                 # global_info tile
            _spec((D_SELF, H_CAT_PAD), res_map, 1),       # W_enc self rows
            _spec((D_REC_FLAT, H_CAT_PAD), res_map, 1),   # W_enc record rows
            _spec((D_GLOB, H_CAT_PAD), res_map, 1),       # W_enc global rows
            _spec((1, H_CAT_PAD), res_map, 1),            # b_enc
            _spec((H_CAT_PAD, H_HEAD), res_map, 1),       # W1
            _spec((1, H_HEAD), res_map, 1),               # b1
            _spec((H_HEAD, OUT_PAD), res_map, 1),         # W2
            _spec((1, OUT_PAD), res_map, 1),              # b2
        ],
        out_specs=_spec((tb, OUT_PAD), act_map),
        compiler_params=pltpu.CompilerParams(
            dimension_semantics=("parallel",),
            vmem_limit_bytes=64 * 1024 * 1024),
        cost_estimate=cost,
    )(self_info, record_flat, global_info,
      ws_p, wr_p, wg_p, benc, w1, b1, w2, b2)

    if slice_output:
        # keep this inside the caller's jit so XLA can fuse it with the
        # consumer; prefer slice_output=False when downstream can take (B,128)
        return out[:, :PRED_DIM]
    return out


# ---------------- pure-JAX reference ----------------
def tenpai_pred_ref(self_info, record, global_info, p):
    h_self = jax.nn.relu(self_info @ p["ws"] + p["bs"])
    h_rec = jax.nn.relu(jnp.mean(record, axis=1) @ p["wr"] + p["br"])
    h_glob = jax.nn.relu(global_info @ p["wg"] + p["bg"])
    x = jnp.concatenate([h_self, h_rec, h_glob], axis=1)
    h1 = jax.nn.relu(x @ p["w1"] + p["b1"])
    return h1 @ p["w2"] + p["b2"]


if __name__ == "__main__":
    key = jax.random.PRNGKey(0)
    k_si, k_rec, k_gi, k_par = jax.random.split(key, 4)

    B = 32
    self_info = jax.random.normal(k_si, (B, D_SELF), jnp.float32)
    record = jax.random.normal(k_rec, (B, T_REC, D_REC), jnp.float32)
    global_info = jax.random.normal(k_gi, (B, D_GLOB), jnp.float32)

    params = init_params(k_par)
    ref = tenpai_pred_ref(self_info, record, global_info, params)

    # f32 path (tight tolerance) -- B=32 with the tb cap gives a 2-step grid,
    # exercising batch tiling with VMEM-resident weights.
    packed_f32 = pack_params(params, compute_dtype=jnp.float32)
    out_f32 = tenpai_pred(self_info, record, global_info, packed_f32)
    out_f32 = jax.block_until_ready(out_f32)
    assert out_f32.shape == (B, PRED_DIM)
    assert jnp.allclose(out_f32, ref, atol=1e-4, rtol=1e-4)

    # bf16 path (default production path): bf16 weights/MXU, f32 accumulate,
    # padded lane-dense output consumed directly (no post-kernel slice).
    packed_bf16 = pack_params(params, compute_dtype=jnp.bfloat16)
    out_pad = tenpai_pred(self_info, record, global_info, packed_bf16,
                          slice_output=False)
    out_pad = jax.block_until_ready(out_pad)
    assert out_pad.shape == (B, OUT_PAD)
    assert jnp.allclose(out_pad[:, :PRED_DIM], ref, atol=1e-1, rtol=1e-1)
    # padded columns are exactly zero (zero W2 columns / zero b2 entries)
    assert jnp.all(out_pad[:, PRED_DIM:] == 0.0)

    print("KERNEL_OK")
</pallas_src>

<mosaic_0001>
module attributes {stable_mosaic.version = 11 : i64} {
  func.func @tenpai_kernel(%arg0: i32, %arg1: memref<16x64xf32, #tpu.memory_space<vmem>>, %arg2: memref<16x256xf32, #tpu.memory_space<vmem>>, %arg3: memref<16x16xf32, #tpu.memory_space<vmem>>, %arg4: memref<64x256xf32, #tpu.memory_space<vmem>>, %arg5: memref<256x256xf32, #tpu.memory_space<vmem>>, %arg6: memref<16x256xf32, #tpu.memory_space<vmem>>, %arg7: memref<1x256xf32, #tpu.memory_space<vmem>>, %arg8: memref<256x256xf32, #tpu.memory_space<vmem>>, %arg9: memref<1x256xf32, #tpu.memory_space<vmem>>, %arg10: memref<256x128xf32, #tpu.memory_space<vmem>>, %arg11: memref<1x128xf32, #tpu.memory_space<vmem>>, %arg12: memref<16x128xf32, #tpu.memory_space<vmem>>) attributes {dimension_semantics = [#tpu.dimension_semantics<parallel>], iteration_bounds = array<i64: 2>, scalar_prefetch = 0 : i64, scratch_operands = 0 : i64, tpu.core_type = #tpu.core_type<tc>, window_params = [{transform_indices = @transform_0, window_bounds = array<i64: 16, 64>}, {transform_indices = @transform_1, window_bounds = array<i64: 16, 256>}, {transform_indices = @transform_2, window_bounds = array<i64: 16, 16>}, {pipeline_mode = #tpu.pipeline_mode<synchronous>, transform_indices = @transform_3, window_bounds = array<i64: 64, 256>}, {pipeline_mode = #tpu.pipeline_mode<synchronous>, transform_indices = @transform_4, window_bounds = array<i64: 256, 256>}, {pipeline_mode = #tpu.pipeline_mode<synchronous>, transform_indices = @transform_5, window_bounds = array<i64: 16, 256>}, {pipeline_mode = #tpu.pipeline_mode<synchronous>, transform_indices = @transform_6, window_bounds = array<i64: 1, 256>}, {pipeline_mode = #tpu.pipeline_mode<synchronous>, transform_indices = @transform_7, window_bounds = array<i64: 256, 256>}, {pipeline_mode = #tpu.pipeline_mode<synchronous>, transform_indices = @transform_8, window_bounds = array<i64: 1, 256>}, {pipeline_mode = #tpu.pipeline_mode<synchronous>, transform_indices = @transform_9, window_bounds = array<i64: 256, 128>}, {pipeline_mode = #tpu.pipeline_mode<synchronous>, transform_indices = @transform_10, window_bounds = array<i64: 1, 128>}, {transform_indices = @transform_11, window_bounds = array<i64: 16, 128>}]} {
    %c0 = arith.constant 0 : index
    %c0_0 = arith.constant 0 : index
    %0 = vector.load %arg1[%c0, %c0_0] : memref<16x64xf32, #tpu.memory_space<vmem>>, vector<16x64xf32>
    %c0_1 = arith.constant 0 : index
    %c0_2 = arith.constant 0 : index
    %1 = vector.load %arg2[%c0_1, %c0_2] : memref<16x256xf32, #tpu.memory_space<vmem>>, vector<16x256xf32>
    %c0_3 = arith.constant 0 : index
    %c0_4 = arith.constant 0 : index
    %2 = vector.load %arg3[%c0_3, %c0_4] : memref<16x16xf32, #tpu.memory_space<vmem>>, vector<16x16xf32>
    %c0_5 = arith.constant 0 : index
    %c0_6 = arith.constant 0 : index
    %3 = vector.load %arg4[%c0_5, %c0_6] : memref<64x256xf32, #tpu.memory_space<vmem>>, vector<64x256xf32>
    %cst = arith.constant dense<0.000000e+00> : vector<16x256xf32>
    %4 = tpu.matmul %0, %3, %cst {dimension_numbers = #tpu.dot_dimension_numbers<[1], [0], [0], [1], [0, 0, 1, 1], [], []>} : vector<16x64xf32>, vector<64x256xf32>, vector<16x256xf32> -> vector<16x256xf32>
    %c0_7 = arith.constant 0 : index
    %c0_8 = arith.constant 0 : index
    %5 = vector.load %arg5[%c0_7, %c0_8] : memref<256x256xf32, #tpu.memory_space<vmem>>, vector<256x256xf32>
    %cst_9 = arith.constant dense<0.000000e+00> : vector<16x256xf32>
    %6 = tpu.matmul %1, %5, %cst_9 {dimension_numbers = #tpu.dot_dimension_numbers<[1], [0], [0], [1], [0, 0, 1, 1], [], []>} : vector<16x256xf32>, vector<256x256xf32>, vector<16x256xf32> -> vector<16x256xf32>
    %7 = arith.addf %4, %6 : vector<16x256xf32>
    %c0_10 = arith.constant 0 : index
    %c0_11 = arith.constant 0 : index
    %8 = vector.load %arg6[%c0_10, %c0_11] : memref<16x256xf32, #tpu.memory_space<vmem>>, vector<16x256xf32>
    %cst_12 = arith.constant dense<0.000000e+00> : vector<16x256xf32>
    %9 = tpu.matmul %2, %8, %cst_12 {dimension_numbers = #tpu.dot_dimension_numbers<[1], [0], [0], [1], [0, 0, 1, 1], [], []>} : vector<16x16xf32>, vector<16x256xf32>, vector<16x256xf32> -> vector<16x256xf32>
    %10 = arith.addf %7, %9 : vector<16x256xf32>
    %c0_13 = arith.constant 0 : index
    %c0_14 = arith.constant 0 : index
    %11 = vector.load %arg7[%c0_13, %c0_14] : memref<1x256xf32, #tpu.memory_space<vmem>>, vector<1x256xf32>
    %12 = vector.broadcast %11 : vector<1x256xf32> to vector<16x256xf32>
    %13 = arith.addf %10, %12 : vector<16x256xf32>
    %cst_15 = arith.constant 0.000000e+00 : f32
    %14 = vector.broadcast %cst_15 : f32 to vector<16x256xf32>
    %15 = arith.maximumf %13, %14 : vector<16x256xf32>
    %c0_16 = arith.constant 0 : index
    %c0_17 = arith.constant 0 : index
    %16 = vector.load %arg8[%c0_16, %c0_17] : memref<256x256xf32, #tpu.memory_space<vmem>>, vector<256x256xf32>
    %cst_18 = arith.constant dense<0.000000e+00> : vector<16x256xf32>
    %17 = tpu.matmul %15, %16, %cst_18 {dimension_numbers = #tpu.dot_dimension_numbers<[1], [0], [0], [1], [0, 0, 1, 1], [], []>} : vector<16x256xf32>, vector<256x256xf32>, vector<16x256xf32> -> vector<16x256xf32>
    %c0_19 = arith.constant 0 : index
    %c0_20 = arith.constant 0 : index
    %18 = vector.load %arg9[%c0_19, %c0_20] : memref<1x256xf32, #tpu.memory_space<vmem>>, vector<1x256xf32>
    %19 = vector.broadcast %18 : vector<1x256xf32> to vector<16x256xf32>
    %20 = arith.addf %17, %19 : vector<16x256xf32>
    %cst_21 = arith.constant 0.000000e+00 : f32
    %21 = vector.broadcast %cst_21 : f32 to vector<16x256xf32>
    %22 = arith.maximumf %20, %21 : vector<16x256xf32>
    %c0_22 = arith.constant 0 : index
    %c0_23 = arith.constant 0 : index
    %23 = vector.load %arg10[%c0_22, %c0_23] : memref<256x128xf32, #tpu.memory_space<vmem>>, vector<256x128xf32>
    %cst_24 = arith.constant dense<0.000000e+00> : vector<16x128xf32>
    %24 = tpu.matmul %22, %23, %cst_24 {dimension_numbers = #tpu.dot_dimension_numbers<[1], [0], [0], [1], [0, 0, 1, 1], [], []>} : vector<16x256xf32>, vector<256x128xf32>, vector<16x128xf32> -> vector<16x128xf32>
    %c0_25 = arith.constant 0 : index
    %c0_26 = arith.constant 0 : index
    %25 = vector.load %arg11[%c0_25, %c0_26] : memref<1x128xf32, #tpu.memory_space<vmem>>, vector<1x128xf32>
    %26 = vector.broadcast %25 : vector<1x128xf32> to vector<16x128xf32>
    %27 = arith.addf %24, %26 : vector<16x128xf32>
    %c0_27 = arith.constant 0 : index
    %c0_28 = arith.constant 0 : index
    %28 = vector.load %arg12[%c0_27, %c0_28] : memref<16x128xf32, #tpu.memory_space<vmem>>, vector<16x128xf32>
    tpu.vector_store %arg12[%c0_27, %c0_28], %27 {strides = array<i32>} : memref<16x128xf32, #tpu.memory_space<vmem>>, vector<16x128xf32>,
    return
  }
  func.func @transform_0(%arg0: i32) -> (i32, i32) {
    %c0_i32 = arith.constant 0 : i32
    %c0_i32_0 = arith.constant 0 : i32
    return %arg0, %c0_i32 : i32, i32
  }
  func.func @transform_1(%arg0: i32) -> (i32, i32) {
    %c0_i32 = arith.constant 0 : i32
    %c0_i32_0 = arith.constant 0 : i32
    return %arg0, %c0_i32 : i32, i32
  }
  func.func @transform_2(%arg0: i32) -> (i32, i32) {
    %c0_i32 = arith.constant 0 : i32
    %c0_i32_0 = arith.constant 0 : i32
    return %arg0, %c0_i32 : i32, i32
  }
  func.func @transform_3(%arg0: i32) -> (i32, i32) {
    %c0_i32 = arith.constant 0 : i32
    %c0_i32_0 = arith.constant 0 : i32
    %c0_i32_1 = arith.constant 0 : i32
    return %c0_i32, %c0_i32_0 : i32, i32
  }
  func.func @transform_4(%arg0: i32) -> (i32, i32) {
    %c0_i32 = arith.constant 0 : i32
    %c0_i32_0 = arith.constant 0 : i32
    %c0_i32_1 = arith.constant 0 : i32
    return %c0_i32, %c0_i32_0 : i32, i32
  }
  func.func @transform_5(%arg0: i32) -> (i32, i32) {
    %c0_i32 = arith.constant 0 : i32
    %c0_i32_0 = arith.constant 0 : i32
    %c0_i32_1 = arith.constant 0 : i32
    return %c0_i32, %c0_i32_0 : i32, i32
  }
  func.func @transform_6(%arg0: i32) -> (i32, i32) {
    %c0_i32 = arith.constant 0 : i32
    %c0_i32_0 = arith.constant 0 : i32
    %c0_i32_1 = arith.constant 0 : i32
    return %c0_i32, %c0_i32_0 : i32, i32
  }
  func.func @transform_7(%arg0: i32) -> (i32, i32) {
    %c0_i32 = arith.constant 0 : i32
    %c0_i32_0 = arith.constant 0 : i32
    %c0_i32_1 = arith.constant 0 : i32
    return %c0_i32, %c0_i32_0 : i32, i32
  }
  func.func @transform_8(%arg0: i32) -> (i32, i32) {
    %c0_i32 = arith.constant 0 : i32
    %c0_i32_0 = arith.constant 0 : i32
    %c0_i32_1 = arith.constant 0 : i32
    return %c0_i32, %c0_i32_0 : i32, i32
  }
  func.func @transform_9(%arg0: i32) -> (i32, i32) {
    %c0_i32 = arith.constant 0 : i32
    %c0_i32_0 = arith.constant 0 : i32
    %c0_i32_1 = arith.constant 0 : i32
    return %c0_i32, %c0_i32_0 : i32, i32
  }
  func.func @transform_10(%arg0: i32) -> (i32, i32) {
    %c0_i32 = arith.constant 0 : i32
    %c0_i32_0 = arith.constant 0 : i32
    %c0_i32_1 = arith.constant 0 : i32
    return %c0_i32, %c0_i32_0 : i32, i32
  }
  func.func @transform_11(%arg0: i32) -> (i32, i32) {
    %c0_i32 = arith.constant 0 : i32
    %c0_i32_0 = arith.constant 0 : i32
    return %arg0, %c0_i32 : i32, i32
  }
}

</mosaic_0001>

<llo_original>
// kernel: tpu_custom_call.1
$region0: #{tpu_custom_call.1}
  #allocation0 [shape = 'u32[]', space=smem, size = 0x4, offset = 0x4, fixed_abs, tag = 'smem constant byte address 0x4 - core index']
  #allocation1 [shape = 'u32[144,128]{1,0:T(1,128)}', space=vmem, size = 0x12000, scoped, tag = 'internal scratch']
  %s0 = inlined_call_operand.hbm [shape: f32[32,64], index: 0, kind: input, shape index: {}]
  %s1 = inlined_call_operand.hbm [shape: f32[32,256], index: 1, kind: input, shape index: {}]
  %s2 = inlined_call_operand.hbm [shape: f32[32,16], index: 2, kind: input, shape index: {}]
  %s3 = inlined_call_operand.hbm [shape: f32[64,256], index: 3, kind: input, shape index: {}]
  %s4 = inlined_call_operand.hbm [shape: f32[256,256], index: 4, kind: input, shape index: {}]
  %s5 = inlined_call_operand.hbm [shape: f32[16,256], index: 5, kind: input, shape index: {}]
  %s6 = inlined_call_operand.hbm [shape: f32[1,256], index: 6, kind: input, shape index: {}]
  %s7 = inlined_call_operand.hbm [shape: f32[256,256], index: 7, kind: input, shape index: {}]
  %s8 = inlined_call_operand.hbm [shape: f32[1,256], index: 8, kind: input, shape index: {}]
  %s9 = inlined_call_operand.hbm [shape: f32[256,128], index: 9, kind: input, shape index: {}]
  %s10 = inlined_call_operand.hbm [shape: f32[1,128], index: 10, kind: input, shape index: {}]
  %s11 = inlined_call_operand.hbm [shape: f32[32,128], index: 11, kind: output, shape index: {}]
  %s12 = sld [smem:[#allocation0]]
  $region121: #{tpu_custom_call.1} parent=0
    _
  %s14 = ssub.s32 1, %s12
  %s15 = scalar_select 0, %s14, %s12
  $region1: #{tpu_custom_call.1} parent=0
    #allocation2 [shape = 'u8[16384]{0}', space=vmem, size = 0x4000, scoped, tag = 'input window, operand 0']
    #allocation3 [shape = 's32[2]{0}', space=sflag, size = 0x8, scoped, tag = 'scoped memory for tpu_custom_call.1']
    #allocation4 [shape = 's32[2]{0}', space=sflag, size = 0x8, scoped, tag = 'scoped memory for tpu_custom_call.1']
    #allocation5 [shape = 'u8[32768]{0}', space=vmem, size = 0x8000, scoped, tag = 'input window, operand 1']
    #allocation6 [shape = 's32[2]{0}', space=sflag, size = 0x8, scoped, tag = 'scoped memory for tpu_custom_call.1']
    #allocation7 [shape = 'u8[16384]{0}', space=vmem, size = 0x4000, scoped, tag = 'input window, operand 2']
    #allocation8 [shape = 'u8[65536]{0}', space=vmem, size = 0x10000, scoped, tag = 'input window, operand 3, single buffered']
    #allocation9 [shape = 's32[1]{0}', space=sflag, size = 0x4, scoped, tag = 'scoped memory for tpu_custom_call.1']
    #allocation10 [shape = 'u8[262144]{0}', space=vmem, size = 0x40000, scoped, tag = 'input window, operand 4, single buffered']
    #allocation11 [shape = 'u8[16384]{0}', space=vmem, size = 0x4000, scoped, tag = 'input window, operand 5, single buffered']
    #allocation12 [shape = 's32[1]{0}', space=sflag, size = 0x4, scoped, tag = 'scoped memory for tpu_custom_call.1']
    #allocation13 [shape = 'u8[1024]{0}', space=vmem, size = 0x400, scoped, tag = 'input window, operand 6, single buffered']
    #allocation14 [shape = 'u8[262144]{0}', space=vmem, size = 0x40000, scoped, tag = 'input window, operand 7, single buffered']
    #allocation15 [shape = 's32[1]{0}', space=sflag, size = 0x4, scoped, tag = 'scoped memory for tpu_custom_call.1']
    #allocation16 [shape = 'u8[1024]{0}', space=vmem, size = 0x400, scoped, tag = 'input window, operand 8, single buffered']
    #allocation17 [shape = 'u8[131072]{0}', space=vmem, size = 0x20000, scoped, tag = 'input window, operand 9, single buffered']
    #allocation18 [shape = 's32[1]{0}', space=sflag, size = 0x4, scoped, tag = 'scoped memory for tpu_custom_call.1']
    #allocation19 [shape = 'u8[512]{0}', space=vmem, size = 0x400, scoped, tag = 'input window, operand 10, single buffered']
    #allocation20 [shape = 'u8[16384]{0}', space=vmem, size = 0x4000, scoped, tag = 'output window, operand 0']
    %16 = vsyncpa [#allocation3], 0
    %s17 = scalar_lea.sflag [#allocation3], 1
    %18 = vsyncpa %s17, 0
    %19 = vsyncpa [#allocation6], 0
    %s20 = scalar_lea.sflag [#allocation6], 1
    %21 = vsyncpa %s20, 0
    %22 = vsyncpa [#allocation9], 0
    %23 = vsyncpa [#allocation12], 0
    %24 = vsyncpa [#allocation15], 0
    %25 = vsyncpa [#allocation18], 0
    %26 = vsyncpa [#allocation4], 0
    %s27 = scalar_lea.sflag [#allocation4], 1
    %28 = vsyncpa %s27, 0
    loop: start=0, step=1, limit=4
    $region2: #{tpu_custom_call.1} parent=1 // loop_pre_header
      _
    $region3: #{tpu_custom_call.1} parent=1 // loop_header
      %s30 = sphi 0, %s34
      %p31 = scmp.ge.s32.totalorder %s30, 4
      %s40 = sphi 0, %s42
      %s43 = sphi 0, %s40
      %s44 = sphi 0, %s43
      %s60 = sphi 0, %s44
      %s66 = sphi 0, %s68
      %s69 = sphi 0, %s66
      %s70 = sphi 0, %s69
      %s86 = sphi 0, %s70
      %s92 = sphi 0, %s94
      %s95 = sphi 0, %s92
      %s96 = sphi 0, %s95
      %s112 = sphi 0, %s96
      %s116 = sphi 0, %s116
      %s118 = sphi 0, %s116
      %s119 = sphi 0, %s118
      %s133 = sphi 0, %s119
      %s137 = sphi 0, %s137
      %s139 = sphi 0, %s137
      %s140 = sphi 0, %s139
      %s154 = sphi 0, %s140
      %s158 = sphi 0, %s158
      %s160 = sphi 0, %s158
      %s161 = sphi 0, %s160
      %s175 = sphi 0, %s161
      %s179 = sphi 0, %s179
      %s181 = sphi 0, %s179
      %s182 = sphi 0, %s181
      %s196 = sphi 0, %s182
      %s200 = sphi 0, %s200
      %s202 = sphi 0, %s200
      %s203 = sphi 0, %s202
      %s217 = sphi 0, %s203
      %s221 = sphi 0, %s221
      %s223 = sphi 0, %s221
      %s224 = sphi 0, %s223
      %s238 = sphi 0, %s224
      %s242 = sphi 0, %s242
      %s244 = sphi 0, %s242
      %s245 = sphi 0, %s244
      %s259 = sphi 0, %s245
      %s263 = sphi 0, %s263
      %s265 = sphi 0, %s263
      %s266 = sphi 0, %s265
      %s280 = sphi 0, %s266
      %s286 = sphi 0, %s288
      %s289 = sphi 0, %s286
      %s290 = sphi 0, %s289
      %s306 = sphi 0, %s290
    $region4: #{tpu_custom_call.1} parent=1 // loop_header_branch
      %33 = sbr.rel (%p31) target = $region8
    $region5: #{tpu_custom_call.1} parent=1 // loop_body
      %s35 = ssub.s32 %s30, 1
      %s36 = ssub.s32 %s30, 2
      %s37 = sadd.s32 %s30, 1
      %s38 = ssub.s32 %s30, %s37
      %p39 = scmp.eq.s32.totalorder %s38, 0
      %s41 = sadd.s32 %s40, 1
      %s42 = scalar_select %p39, %s40, %s41
      %p45 = pneg %p39
      %p46 = scmp.eq.s32.totalorder %s30, 1
      %p47 = por %p45, %p46
      %p48 = scmp.ne.s32.totalorder %s40, %s43
      %p49 = scmp.eq.s32.totalorder %s30, 0
      %p50 = por %p48, %p49
      %p51 = scmp.ne.s32.totalorder %s40, %s43
      %p52 = scmp.eq.s32.totalorder %s35, 1
      %p53 = por %p51, %p52
      %p54 = scmp.ne.s32.totalorder %s43, %s44
      %p55 = scmp.eq.s32.totalorder %s35, 0
      %p56 = por %p54, %p55
      %p57 = scmp.ne.s32.totalorder %s43, %s44
      %p58 = scmp.eq.s32.totalorder %s36, 1
      %p59 = por %p57, %p58
      %p61 = scmp.ne.s32.totalorder %s44, %s60
      %p62 = scmp.eq.s32.totalorder %s36, 0
      %p63 = por %p61, %p62
      %s64 = ssub.s32 %s30, %s37
      %p65 = scmp.eq.s32.totalorder %s64, 0
      %s67 = sadd.s32 %s66, 1
      %s68 = scalar_select %p65, %s66, %s67
      %p71 = pneg %p65
      %p72 = scmp.eq.s32.totalorder %s30, 1
      %p73 = por %p71, %p72
      %p74 = scmp.ne.s32.totalorder %s66, %s69
      %p75 = scmp.eq.s32.totalorder %s30, 0
      %p76 = por %p74, %p75
      %p77 = scmp.ne.s32.totalorder %s66, %s69
      %p78 = scmp.eq.s32.totalorder %s35, 1
      %p79 = por %p77, %p78
      %p80 = scmp.ne.s32.totalorder %s69, %s70
      %p81 = scmp.eq.s32.totalorder %s35, 0
      %p82 = por %p80, %p81
      %p83 = scmp.ne.s32.totalorder %s69, %s70
      %p84 = scmp.eq.s32.totalorder %s36, 1
      %p85 = por %p83, %p84
      %p87 = scmp.ne.s32.totalorder %s70, %s86
      %p88 = scmp.eq.s32.totalorder %s36, 0
      %p89 = por %p87, %p88
      %s90 = ssub.s32 %s30, %s37
      %p91 = scmp.eq.s32.totalorder %s90, 0
      %s93 = sadd.s32 %s92, 1
      %s94 = scalar_select %p91, %s92, %s93
      %p97 = pneg %p91
      %p98 = scmp.eq.s32.totalorder %s30, 1
      %p99 = por %p97, %p98
      %p100 = scmp.ne.s32.totalorder %s92, %s95
      %p101 = scmp.eq.s32.totalorder %s30, 0
      %p102 = por %p100, %p101
      %p103 = scmp.ne.s32.totalorder %s92, %s95
      %p104 = scmp.eq.s32.totalorder %s35, 1
      %p105 = por %p103, %p104
      %p106 = scmp.ne.s32.totalorder %s95, %s96
      %p107 = scmp.eq.s32.totalorder %s35, 0
      %p108 = por %p106, %p107
      %p109 = scmp.ne.s32.totalorder %s95, %s96
      %p110 = scmp.eq.s32.totalorder %s36, 1
      %p111 = por %p109, %p110
      %p113 = scmp.ne.s32.totalorder %s96, %s112
      %p114 = scmp.eq.s32.totalorder %s36, 0
      %p115 = por %p113, %p114
      %s117 = sadd.s32 %s116, 1
      %p120 = scmp.eq.s32.totalorder %s30, 1
      %p121 = scmp.ne.s32.totalorder %s116, %s118
      %p122 = scmp.eq.s32.totalorder %s30, 0
      %p123 = por %p121, %p122
      %p124 = scmp.ne.s32.totalorder %s116, %s118
      %p125 = scmp.eq.s32.totalorder %s35, 1
      %p126 = por %p124, %p125
      %p127 = scmp.ne.s32.totalorder %s118, %s119
      %p128 = scmp.eq.s32.totalorder %s35, 0
      %p129 = por %p127, %p128
      %p130 = scmp.ne.s32.totalorder %s118, %s119
      %p131 = scmp.eq.s32.totalorder %s36, 1
      %p132 = por %p130, %p131
      %p134 = scmp.ne.s32.totalorder %s119, %s133
      %p135 = scmp.eq.s32.totalorder %s36, 0
      %p136 = por %p134, %p135
      %s138 = sadd.s32 %s137, 1
      %p141 = scmp.eq.s32.totalorder %s30, 1
      %p142 = scmp.ne.s32.totalorder %s137, %s139
      %p143 = scmp.eq.s32.totalorder %s30, 0
      %p144 = por %p142, %p143
      %p145 = scmp.ne.s32.totalorder %s137, %s139
      %p146 = scmp.eq.s32.totalorder %s35, 1
      %p147 = por %p145, %p146
      %p148 = scmp.ne.s32.totalorder %s139, %s140
      %p149 = scmp.eq.s32.totalorder %s35, 0
      %p150 = por %p148, %p149
      %p151 = scmp.ne.s32.totalorder %s139, %s140
      %p152 = scmp.eq.s32.totalorder %s36, 1
      %p153 = por %p151, %p152
      %p155 = scmp.ne.s32.totalorder %s140, %s154
      %p156 = scmp.eq.s32.totalorder %s36, 0
      %p157 = por %p155, %p156
      %s159 = sadd.s32 %s158, 1
      %p162 = scmp.eq.s32.totalorder %s30, 1
      %p163 = scmp.ne.s32.totalorder %s158, %s160
      %p164 = scmp.eq.s32.totalorder %s30, 0
      %p165 = por %p163, %p164
      %p166 = scmp.ne.s32.totalorder %s158, %s160
      %p167 = scmp.eq.s32.totalorder %s35, 1
      %p168 = por %p166, %p167
      %p169 = scmp.ne.s32.totalorder %s160, %s161
      %p170 = scmp.eq.s32.totalorder %s35, 0
      %p171 = por %p169, %p170
      %p172 = scmp.ne.s32.totalorder %s160, %s161
      %p173 = scmp.eq.s32.totalorder %s36, 1
      %p174 = por %p172, %p173
      %p176 = scmp.ne.s32.totalorder %s161, %s175
      %p177 = scmp.eq.s32.totalorder %s36, 0
      %p178 = por %p176, %p177
      %s180 = sadd.s32 %s179, 1
      %p183 = scmp.eq.s32.totalorder %s30, 1
      %p184 = scmp.ne.s32.totalorder %s179, %s181
      %p185 = scmp.eq.s32.totalorder %s30, 0
      %p186 = por %p184, %p185
      %p187 = scmp.ne.s32.totalorder %s179, %s181
      %p188 = scmp.eq.s32.totalorder %s35, 1
      %p189 = por %p187, %p188
      %p190 = scmp.ne.s32.totalorder %s181, %s182
      %p191 = scmp.eq.s32.totalorder %s35, 0
      %p192 = por %p190, %p191
      %p193 = scmp.ne.s32.totalorder %s181, %s182
      %p194 = scmp.eq.s32.totalorder %s36, 1
      %p195 = por %p193, %p194
      %p197 = scmp.ne.s32.totalorder %s182, %s196
      %p198 = scmp.eq.s32.totalorder %s36, 0
      %p199 = por %p197, %p198
      %s201 = sadd.s32 %s200, 1
      %p204 = scmp.eq.s32.totalorder %s30, 1
      %p205 = scmp.ne.s32.totalorder %s200, %s202
      %p206 = scmp.eq.s32.totalorder %s30, 0
      %p207 = por %p205, %p206
      %p208 = scmp.ne.s32.totalorder %s200, %s202
      %p209 = scmp.eq.s32.totalorder %s35, 1
      %p210 = por %p208, %p209
      %p211 = scmp.ne.s32.totalorder %s202, %s203
      %p212 = scmp.eq.s32.totalorder %s35, 0
      %p213 = por %p211, %p212
      %p214 = scmp.ne.s32.totalorder %s202, %s203
      %p215 = scmp.eq.s32.totalorder %s36, 1
      %p216 = por %p214, %p215
      %p218 = scmp.ne.s32.totalorder %s203, %s217
      %p219 = scmp.eq.s32.totalorder %s36, 0
      %p220 = por %p218, %p219
      %s222 = sadd.s32 %s221, 1
      %p225 = scmp.eq.s32.totalorder %s30, 1
      %p226 = scmp.ne.s32.totalorder %s221, %s223
      %p227 = scmp.eq.s32.totalorder %s30, 0
      %p228 = por %p226, %p227
      %p229 = scmp.ne.s32.totalorder %s221, %s223
      %p230 = scmp.eq.s32.totalorder %s35, 1
      %p231 = por %p229, %p230
      %p232 = scmp.ne.s32.totalorder %s223, %s224
      %p233 = scmp.eq.s32.totalorder %s35, 0
      %p234 = por %p232, %p233
      %p235 = scmp.ne.s32.totalorder %s223, %s224
      %p236 = scmp.eq.s32.totalorder %s36, 1
      %p237 = por %p235, %p236
      %p239 = scmp.ne.s32.totalorder %s224, %s238
      %p240 = scmp.eq.s32.totalorder %s36, 0
      %p241 = por %p239, %p240
      %s243 = sadd.s32 %s242, 1
      %p246 = scmp.eq.s32.totalorder %s30, 1
      %p247 = scmp.ne.s32.totalorder %s242, %s244
      %p248 = scmp.eq.s32.totalorder %s30, 0
      %p249 = por %p247, %p248
      %p250 = scmp.ne.s32.totalorder %s242, %s244
      %p251 = scmp.eq.s32.totalorder %s35, 1
      %p252 = por %p250, %p251
      %p253 = scmp.ne.s32.totalorder %s244, %s245
      %p254 = scmp.eq.s32.totalorder %s35, 0
      %p255 = por %p253, %p254
      %p256 = scmp.ne.s32.totalorder %s244, %s245
      %p257 = scmp.eq.s32.totalorder %s36, 1
      %p258 = por %p256, %p257
      %p260 = scmp.ne.s32.totalorder %s245, %s259
      %p261 = scmp.eq.s32.totalorder %s36, 0
      %p262 = por %p260, %p261
      %s264 = sadd.s32 %s263, 1
      %p267 = scmp.eq.s32.totalorder %s30, 1
      %p268 = scmp.ne.s32.totalorder %s263, %s265
      %p269 = scmp.eq.s32.totalorder %s30, 0
      %p270 = por %p268, %p269
      %p271 = scmp.ne.s32.totalorder %s263, %s265
      %p272 = scmp.eq.s32.totalorder %s35, 1
      %p273 = por %p271, %p272
      %p274 = scmp.ne.s32.totalorder %s265, %s266
      %p275 = scmp.eq.s32.totalorder %s35, 0
      %p276 = por %p274, %p275
      %p277 = scmp.ne.s32.totalorder %s265, %s266
      %p278 = scmp.eq.s32.totalorder %s36, 1
      %p279 = por %p277, %p278
      %p281 = scmp.ne.s32.totalorder %s266, %s280
      %p282 = scmp.eq.s32.totalorder %s36, 0
      %p283 = por %p281, %p282
      %s284 = ssub.s32 %s30, %s37
      %p285 = scmp.eq.s32.totalorder %s284, 0
      %s287 = sadd.s32 %s286, 1
      %s288 = scalar_select %p285, %s286, %s287
      %p291 = pneg %p285
      %p292 = scmp.eq.s32.totalorder %s30, 1
      %p293 = por %p291, %p292
      %p294 = scmp.ne.s32.totalorder %s286, %s289
      %p295 = scmp.eq.s32.totalorder %s30, 0
      %p296 = por %p294, %p295
      %p297 = scmp.ne.s32.totalorder %s286, %s289
      %p298 = scmp.eq.s32.totalorder %s35, 1
      %p299 = por %p297, %p298
      %p300 = scmp.ne.s32.totalorder %s289, %s290
      %p301 = scmp.eq.s32.totalorder %s35, 0
      %p302 = por %p300, %p301
      %p303 = scmp.ne.s32.totalorder %s289, %s290
      %p304 = scmp.eq.s32.totalorder %s36, 1
      %p305 = por %p303, %p304
      %p307 = scmp.ne.s32.totalorder %s290, %s306
      %p308 = scmp.eq.s32.totalorder %s36, 0
      %p309 = por %p307, %p308
      %p310 = scmp.le.s32.totalorder 1, %s30
      %p311 = scmp.lt.s32.totalorder %s30, 3
      %p312 = pnand %p310, %p311
      %p313 = pneg %p312
      // Predicated region
      $region9: #{tpu_custom_call.1} parent=5 // pred_check
        _
      $region10: #{tpu_custom_call.1} parent=5 // pred_check_branch
        %315 = sbr.rel (%p312) target = $region12
      $region11: #{tpu_custom_call.1} parent=5 // pred_region
        %s316 = ssub.s32 %s30, 1
        // Predicated region
        $region13: #{tpu_custom_call.1} parent=11 // pred_check
          %p317 = pneg %p129
        $region14: #{tpu_custom_call.1} parent=11 // pred_check_branch
          %319 = sbr.rel (%p317) target = $region16
        $region15: #{tpu_custom_call.1} parent=11 // pred_region
          %s321 = ssub.s32 2048, 2048
          %322 = vsyncadd [#allocation9], %s321
          %s323 = sshll.u32 [#allocation8], 4
          %s324 = int_to_ptr.vmem [resolvable:$true] %s323
          %329 = dma.hbm_to_vmem [thread:$0]  %s3, 2048, %s324, [#allocation9], 256, 256, 16
        $region16: #{tpu_custom_call.1} parent=11 // pred_fallthru
          _
        // Predicated region
        $region17: #{tpu_custom_call.1} parent=11 // pred_check
          %p330 = pneg %p150
        $region18: #{tpu_custom_call.1} parent=11 // pred_check_branch
          %332 = sbr.rel (%p330) target = $region20
        $region19: #{tpu_custom_call.1} parent=11 // pred_region
          %s334 = ssub.s32 8192, 8192
          %335 = vsyncadd [#allocation9], %s334
          %s336 = sshll.u32 [#allocation10], 4
          %s337 = int_to_ptr.vmem [resolvable:$true] %s336
          %342 = dma.hbm_to_vmem [thread:$0]  %s4, 8192, %s337, [#allocation9], 256, 256, 16
        $region20: #{tpu_custom_call.1} parent=11 // pred_fallthru
          _
        // Predicated region
        $region21: #{tpu_custom_call.1} parent=11 // pred_check
          %p343 = pneg %p171
        $region22: #{tpu_custom_call.1} parent=11 // pred_check_branch
          %345 = sbr.rel (%p343) target = $region24
        $region23: #{tpu_custom_call.1} parent=11 // pred_region
          %s347 = ssub.s32 512, 512
          %348 = vsyncadd [#allocation12], %s347
          %s349 = sshll.u32 [#allocation11], 4
          %s350 = int_to_ptr.vmem [resolvable:$true] %s349
          %355 = dma.hbm_to_vmem [thread:$0]  %s5, 512, %s350, [#allocation12], 256, 256, 16
        $region24: #{tpu_custom_call.1} parent=11 // pred_fallthru
          _
        // Predicated region
        $region25: #{tpu_custom_call.1} parent=11 // pred_check
          %p356 = pneg %p192
        $region26: #{tpu_custom_call.1} parent=11 // pred_check_branch
          %358 = sbr.rel (%p356) target = $region28
        $region27: #{tpu_custom_call.1} parent=11 // pred_region
          %s360 = ssub.s32 32, 32
          %361 = vsyncadd [#allocation12], %s360
          %s363 = sshll.u32 [#allocation13], 4
          %s364 = int_to_ptr.vmem [resolvable:$true] %s363
          %366 = dma.hbm_to_vmem [thread:$0]  %s6, 32, %s364, [#allocation12]
        $region28: #{tpu_custom_call.1} parent=11 // pred_fallthru
          _
        // Predicated region
        $region29: #{tpu_custom_call.1} parent=11 // pred_check
          %p367 = pneg %p213
        $region30: #{tpu_custom_call.1} parent=11 // pred_check_branch
          %369 = sbr.rel (%p367) target = $region32
        $region31: #{tpu_custom_call.1} parent=11 // pred_region
          %s371 = ssub.s32 8192, 8192
          %372 = vsyncadd [#allocation15], %s371
          %s373 = sshll.u32 [#allocation14], 4
          %s374 = int_to_ptr.vmem [resolvable:$true] %s373
          %379 = dma.hbm_to_vmem [thread:$0]  %s7, 8192, %s374, [#allocation15], 256, 256, 16
        $region32: #{tpu_custom_call.1} parent=11 // pred_fallthru
          _
        // Predicated region
        $region33: #{tpu_custom_call.1} parent=11 // pred_check
          %p380 = pneg %p234
        $region34: #{tpu_custom_call.1} parent=11 // pred_check_branch
          %382 = sbr.rel (%p380) target = $region36
        $region35: #{tpu_custom_call.1} parent=11 // pred_region
          %s384 = ssub.s32 32, 32
          %385 = vsyncadd [#allocation15], %s384
          %s387 = sshll.u32 [#allocation16], 4
          %s388 = int_to_ptr.vmem [resolvable:$true] %s387
          %390 = dma.hbm_to_vmem [thread:$0]  %s8, 32, %s388, [#allocation15]
        $region36: #{tpu_custom_call.1} parent=11 // pred_fallthru
          _
        // Predicated region
        $region37: #{tpu_custom_call.1} parent=11 // pred_check
          %p391 = pneg %p255
        $region38: #{tpu_custom_call.1} parent=11 // pred_check_branch
          %393 = sbr.rel (%p391) target = $region40
        $region39: #{tpu_custom_call.1} parent=11 // pred_region
          %s395 = ssub.s32 4096, 4096
          %396 = vsyncadd [#allocation18], %s395
          %s397 = sshll.u32 [#allocation17], 4
          %s398 = int_to_ptr.vmem [resolvable:$true] %s397
          %403 = dma.hbm_to_vmem [thread:$0]  %s9, 4096, %s398, [#allocation18], 128, 128, 8
        $region40: #{tpu_custom_call.1} parent=11 // pred_fallthru
          _
        // Predicated region
        $region41: #{tpu_custom_call.1} parent=11 // pred_check
          %p404 = pneg %p276
        $region42: #{tpu_custom_call.1} parent=11 // pred_check_branch
          %406 = sbr.rel (%p404) target = $region44
        $region43: #{tpu_custom_call.1} parent=11 // pred_region
          %s408 = ssub.s32 16, 16
          %409 = vsyncadd [#allocation18], %s408
          %s411 = sshll.u32 [#allocation19], 4
          %s412 = int_to_ptr.vmem [resolvable:$true] %s411
          %414 = dma.hbm_to_vmem [thread:$0]  %s10, 16, %s412, [#allocation18]
        $region44: #{tpu_custom_call.1} parent=11 // pred_fallthru
          _
      $region12: #{tpu_custom_call.1} parent=5 // pred_fallthru
        _
      %p415 = scmp.lt.s32.totalorder %s30, 2
      // Predicated region
      $region45: #{tpu_custom_call.1} parent=5 // pred_check
        %p416 = pneg %p415
      $region46: #{tpu_custom_call.1} parent=5 // pred_check_branch
        %418 = sbr.rel (%p416) target = $region48
      $region47: #{tpu_custom_call.1} parent=5 // pred_region
        // Predicated region
        $region49: #{tpu_custom_call.1} parent=47 // pred_check
          %p419 = pneg %p50
        $region50: #{tpu_custom_call.1} parent=47 // pred_check_branch
          %421 = sbr.rel (%p419) target = $region52
        $region51: #{tpu_custom_call.1} parent=47 // pred_region
          %s422 = sand.u32 %s40, 1
          %s423 = scalar_lea.sflag [#allocation3], %s422
          %s424 = sand.u32 %s40, 1
          %s425 = smul.addr %s424, 16
          %s426 = scalar_lea.vmem [#allocation2], %s425
          %s427 = smul.u32 2, %s30
          %s429 = ssub.s32 256, 256
          %430 = vsyncadd %s423, %s429
          %s431 = smul.addr %s427, 128
          %s432 = scalar_lea.hbm %s0, %s431
          %s433 = sshll.u32 %s426, 4
          %s434 = int_to_ptr.vmem [resolvable:$true] %s433
          %439 = dma.hbm_to_vmem [thread:$0]  %s432, 256, %s434, %s423, 128, 128, 8
        $region52: #{tpu_custom_call.1} parent=47 // pred_fallthru
          _
        // Predicated region
        $region53: #{tpu_custom_call.1} parent=47 // pred_check
          %p440 = pneg %p76
        $region54: #{tpu_custom_call.1} parent=47 // pred_check_branch
          %442 = sbr.rel (%p440) target = $region56
        $region55: #{tpu_custom_call.1} parent=47 // pred_region
          %s443 = sand.u32 %s30, 1
          %s444 = scalar_lea.sflag [#allocation6], %s443
          %s445 = sand.u32 %s66, 1
          %s446 = smul.addr %s445, 32
          %s447 = scalar_lea.vmem [#allocation5], %s446
          %s448 = smul.u32 2, %s30
          %s450 = ssub.s32 512, 512
          %451 = vsyncadd %s444, %s450
          %s452 = smul.addr %s448, 2
          %s453 = smul.addr %s452, 128
          %s454 = scalar_lea.hbm %s1, %s453
          %s455 = sshll.u32 %s447, 4
          %s456 = int_to_ptr.vmem [resolvable:$true] %s455
          %461 = dma.hbm_to_vmem [thread:$0]  %s454, 512, %s456, %s444, 256, 256, 16
        $region56: #{tpu_custom_call.1} parent=47 // pred_fallthru
          _
        // Predicated region
        $region57: #{tpu_custom_call.1} parent=47 // pred_check
          %p462 = pneg %p102
        $region58: #{tpu_custom_call.1} parent=47 // pred_check_branch
          %464 = sbr.rel (%p462) target = $region60
        $region59: #{tpu_custom_call.1} parent=47 // pred_region
          %s465 = sand.u32 %s30, 1
          %s466 = scalar_lea.sflag [#allocation6], %s465
          %s467 = sand.u32 %s92, 1
          %s468 = smul.addr %s467, 16
          %s469 = scalar_lea.vmem [#allocation7], %s468
          %s470 = smul.u32 2, %s30
          %s472 = ssub.s32 256, 256
          %473 = vsyncadd %s466, %s472
          %s474 = smul.addr %s470, 128
          %s475 = scalar_lea.hbm %s2, %s474
          %s476 = sshll.u32 %s469, 4
          %s477 = int_to_ptr.vmem [resolvable:$true] %s476
          %482 = dma.hbm_to_vmem [thread:$0]  %s475, 256, %s477, %s466, 128, 128, 8
        $region60: #{tpu_custom_call.1} parent=47 // pred_fallthru
          _
      $region48: #{tpu_custom_call.1} parent=5 // pred_fallthru
        _
      %p483 = scmp.le.s32.totalorder 1, %s30
      %p484 = scmp.lt.s32.totalorder %s30, 3
      %p485 = pnand %p483, %p484
      %p486 = pneg %p485
      // Predicated region
      $region61: #{tpu_custom_call.1} parent=5 // pred_check
        _
      $region62: #{tpu_custom_call.1} parent=5 // pred_check_branch
        %488 = sbr.rel (%p485) target = $region64
      $region63: #{tpu_custom_call.1} parent=5 // pred_region
        %s489 = ssub.s32 %s30, 1
        %s490 = sand.u32 %s43, 1
        %s491 = scalar_lea.sflag [#allocation3], %s490
        %s492 = sand.u32 %s43, 1
        %s493 = smul.addr %s492, 16
        %s494 = scalar_lea.vmem [#allocation2], %s493
        // Predicated region
        $region65: #{tpu_custom_call.1} parent=63 // pred_check
          %p495 = pneg %p56
        $region66: #{tpu_custom_call.1} parent=63 // pred_check_branch
          %497 = sbr.rel (%p495) target = $region68
        $region67: #{tpu_custom_call.1} parent=63 // pred_region
          %498 = dma.done %s491, 256
        $region68: #{tpu_custom_call.1} parent=63 // pred_fallthru
          _
        %s499 = sand.u32 %s35, 1
        %s500 = scalar_lea.sflag [#allocation6], %s499
        %s501 = sand.u32 %s69, 1
        %s502 = smul.addr %s501, 32
        %s503 = scalar_lea.vmem [#allocation5], %s502
        // Predicated region
        $region69: #{tpu_custom_call.1} parent=63 // pred_check
          %p504 = pneg %p82
        $region70: #{tpu_custom_call.1} parent=63 // pred_check_branch
          %506 = sbr.rel (%p504) target = $region72
        $region71: #{tpu_custom_call.1} parent=63 // pred_region
          %507 = dma.done %s500, 512
        $region72: #{tpu_custom_call.1} parent=63 // pred_fallthru
          _
        %s508 = sand.u32 %s35, 1
        %s509 = scalar_lea.sflag [#allocation6], %s508
        %s510 = sand.u32 %s95, 1
        %s511 = smul.addr %s510, 16
        %s512 = scalar_lea.vmem [#allocation7], %s511
        // Predicated region
        $region73: #{tpu_custom_call.1} parent=63 // pred_check
          %p513 = pneg %p108
        $region74: #{tpu_custom_call.1} parent=63 // pred_check_branch
          %515 = sbr.rel (%p513) target = $region76
        $region75: #{tpu_custom_call.1} parent=63 // pred_region
          %516 = dma.done %s509, 256
        $region76: #{tpu_custom_call.1} parent=63 // pred_fallthru
          _
        // Predicated region
        $region77: #{tpu_custom_call.1} parent=63 // pred_check
          %p517 = pneg %p129
        $region78: #{tpu_custom_call.1} parent=63 // pred_check_branch
          %519 = sbr.rel (%p517) target = $region80
        $region79: #{tpu_custom_call.1} parent=63 // pred_region
          %520 = dma.done [#allocation9], 2048
        $region80: #{tpu_custom_call.1} parent=63 // pred_fallthru
          _
        // Predicated region
        $region81: #{tpu_custom_call.1} parent=63 // pred_check
          %p521 = pneg %p150
        $region82: #{tpu_custom_call.1} parent=63 // pred_check_branch
          %523 = sbr.rel (%p521) target = $region84
        $region83: #{tpu_custom_call.1} parent=63 // pred_region
          %524 = dma.done [#allocation9], 8192
        $region84: #{tpu_custom_call.1} parent=63 // pred_fallthru
          _
        // Predicated region
        $region85: #{tpu_custom_call.1} parent=63 // pred_check
          %p525 = pneg %p171
        $region86: #{tpu_custom_call.1} parent=63 // pred_check_branch
          %527 = sbr.rel (%p525) target = $region88
        $region87: #{tpu_custom_call.1} parent=63 // pred_region
          %528 = dma.done [#allocation12], 512
        $region88: #{tpu_custom_call.1} parent=63 // pred_fallthru
          _
        // Predicated region
        $region89: #{tpu_custom_call.1} parent=63 // pred_check
          %p529 = pneg %p192
        $region90: #{tpu_custom_call.1} parent=63 // pred_check_branch
          %531 = sbr.rel (%p529) target = $region92
        $region91: #{tpu_custom_call.1} parent=63 // pred_region
          %532 = dma.done [#allocation12], 32
        $region92: #{tpu_custom_call.1} parent=63 // pred_fallthru
          _
        // Predicated region
        $region93: #{tpu_custom_call.1} parent=63 // pred_check
          %p533 = pneg %p213
        $region94: #{tpu_custom_call.1} parent=63 // pred_check_branch
          %535 = sbr.rel (%p533) target = $region96
        $region95: #{tpu_custom_call.1} parent=63 // pred_region
          %536 = dma.done [#allocation15], 8192
        $region96: #{tpu_custom_call.1} parent=63 // pred_fallthru
          _
        // Predicated region
        $region97: #{tpu_custom_call.1} parent=63 // pred_check
          %p537 = pneg %p234
        $region98: #{tpu_custom_call.1} parent=63 // pred_check_branch
          %539 = sbr.rel (%p537) target = $region100
        $region99: #{tpu_custom_call.1} parent=63 // pred_region
          %540 = dma.done [#allocation15], 32
        $region100: #{tpu_custom_call.1} parent=63 // pred_fallthru
          _
        // Predicated region
        $region101: #{tpu_custom_call.1} parent=63 // pred_check
          %p541 = pneg %p255
        $region102: #{tpu_custom_call.1} parent=63 // pred_check_branch
          %543 = sbr.rel (%p541) target = $region104
        $region103: #{tpu_custom_call.1} parent=63 // pred_region
          %544 = dma.done [#allocation18], 4096
        $region104: #{tpu_custom_call.1} parent=63 // pred_fallthru
          _
        // Predicated region
        $region105: #{tpu_custom_call.1} parent=63 // pred_check
          %p545 = pneg %p276
        $region106: #{tpu_custom_call.1} parent=63 // pred_check_branch
          %547 = sbr.rel (%p545) target = $region108
        $region107: #{tpu_custom_call.1} parent=63 // pred_region
          %548 = dma.done [#allocation18], 16
        $region108: #{tpu_custom_call.1} parent=63 // pred_fallthru
          _
        %s549 = sand.u32 %s43, 1
        %s550 = scalar_lea.sflag [#allocation3], %s549
        %s551 = sand.u32 %s43, 1
        %s552 = smul.addr %s551, 16
        %s553 = scalar_lea.vmem [#allocation2], %s552
        %p554 = pneg %p56
        %p555 = pneg %p53
        %s556 = sand.u32 %s35, 1
        %s557 = scalar_lea.sflag [#allocation6], %s556
        %s558 = sand.u32 %s69, 1
        %s559 = smul.addr %s558, 32
        %s560 = scalar_lea.vmem [#allocation5], %s559
        %p561 = pneg %p82
        %p562 = pneg %p79
        %s563 = sand.u32 %s35, 1
        %s564 = scalar_lea.sflag [#allocation6], %s563
        %s565 = sand.u32 %s95, 1
        %s566 = smul.addr %s565, 16
        %s567 = scalar_lea.vmem [#allocation7], %s566
        %p568 = pneg %p108
        %p569 = pneg %p105
        %p570 = pneg %p129
        %p571 = pneg %p126
        %p572 = pneg %p150
        %p573 = pneg %p147
        %p574 = pneg %p171
        %p575 = pneg %p168
        %p576 = pneg %p192
        %p577 = pneg %p189
        %p578 = pneg %p213
        %p579 = pneg %p210
        %p580 = pneg %p234
        %p581 = pneg %p231
        %p582 = pneg %p255
        %p583 = pneg %p252
        %p584 = pneg %p276
        %p585 = pneg %p273
        %p586 = pneg %p302
        %p587 = pneg %p299
        %s588 = sand.u32 %s289, 1
        %s589 = scalar_lea.sflag [#allocation4], %s588
        %s590 = sand.u32 %s289, 1
        %s591 = smul.addr %s590, 16
        %s592 = scalar_lea.vmem [#allocation20], %s591
        %s593 = smul.u32 2, %s35
        %s594 = smul.u32 2, %s35
        %s595 = smul.u32 2, %s35
        %s596 = smul.u32 2, %s35
        %v597 = vld [vmem:[%s494] sm:$0xff]
        %v598 = vld [vmem:[%s494 + $0x8] sm:$0xff]
        %v599 = vld [vmem:[%s503] sm:$0xff]
        %v600 = vld [vmem:[%s503 + $0x8] sm:$0xff]
        %v601 = vld [vmem:[%s503 + $0x10] sm:$0xff]
        %v602 = vld [vmem:[%s503 + $0x18] sm:$0xff]
        %v603 = vld [vmem:[%s512] sm:$0xff]
        %v604 = vld [vmem:[%s512 + $0x8] sm:$0xff]
        %v605 = vld [vmem:[#allocation8] sm:$0xff]
        %v606 = vld [vmem:[#allocation8 + $0x8] sm:$0xff]
        %v607 = vld [vmem:[#allocation8 + $0x10] sm:$0xff]
        %v608 = vld [vmem:[#allocation8 + $0x18] sm:$0xff]
        %v609 = vld [vmem:[#allocation8 + $0x20] sm:$0xff]
        %v610 = vld [vmem:[#allocation8 + $0x28] sm:$0xff]
        %v611 = vld [vmem:[#allocation8 + $0x30] sm:$0xff]
        %v612 = vld [vmem:[#allocation8 + $0x38] sm:$0xff]
        %v613 = vld [vmem:[#allocation8 + $0x40] sm:$0xff]
        %v614 = vld [vmem:[#allocation8 + $0x48] sm:$0xff]
        %v615 = vld [vmem:[#allocation8 + $0x50] sm:$0xff]
        %v616 = vld [vmem:[#allocation8 + $0x58] sm:$0xff]
        %v617 = vld [vmem:[#allocation8 + $0x60] sm:$0xff]
        %v618 = vld [vmem:[#allocation8 + $0x68] sm:$0xff]
        %v619 = vld [vmem:[#allocation8 + $0x70] sm:$0xff]
        %v620 = vld [vmem:[#allocation8 + $0x78] sm:$0xff]
        %v621 = vld [vmem:[#allocation10] sm:$0xff]
        %v622 = vld [vmem:[#allocation10 + $0x8] sm:$0xff]
        %v623 = vld [vmem:[#allocation10 + $0x10] sm:$0xff]
        %v624 = vld [vmem:[#allocation10 + $0x18] sm:$0xff]
        %v625 = vld [vmem:[#allocation10 + $0x20] sm:$0xff]
        %v626 = vld [vmem:[#allocation10 + $0x28] sm:$0xff]
        %v627 = vld [vmem:[#allocation10 + $0x30] sm:$0xff]
        %v628 = vld [vmem:[#allocation10 + $0x38] sm:$0xff]
        %v629 = vld [vmem:[#allocation10 + $0x40] sm:$0xff]
        %v630 = vld [vmem:[#allocation10 + $0x48] sm:$0xff]
        %v631 = vld [vmem:[#allocation10 + $0x50] sm:$0xff]
        %v632 = vld [vmem:[#allocation10 + $0x58] sm:$0xff]
        %v633 = vld [vmem:[#allocation10 + $0x60] sm:$0xff]
        %v634 = vld [vmem:[#allocation10 + $0x68] sm:$0xff]
        %v635 = vld [vmem:[#allocation10 + $0x70] sm:$0xff]
        %v636 = vld [vmem:[#allocation10 + $0x78] sm:$0xff]
        %v637 = vld [vmem:[#allocation10 + $0x80] sm:$0xff]
        %v638 = vld [vmem:[#allocation10 + $0x88] sm:$0xff]
        %v639 = vld [vmem:[#allocation10 + $0x90] sm:$0xff]
        %v640 = vld [vmem:[#allocation10 + $0x98] sm:$0xff]
        %v641 = vld [vmem:[#allocation10 + $0xa0] sm:$0xff]
        %v642 = vld [vmem:[#allocation10 + $0xa8] sm:$0xff]
        %v643 = vld [vmem:[#allocation10 + $0xb0] sm:$0xff]
        %v644 = vld [vmem:[#allocation10 + $0xb8] sm:$0xff]
        %v645 = vld [vmem:[#allocation10 + $0xc0] sm:$0xff]
        %v646 = vld [vmem:[#allocation10 + $0xc8] sm:$0xff]
        %v647 = vld [vmem:[#allocation10 + $0xd0] sm:$0xff]
        %v648 = vld [vmem:[#allocation10 + $0xd8] sm:$0xff]
        %v649 = vld [vmem:[#allocation10 + $0xe0] sm:$0xff]
        %v650 = vld [vmem:[#allocation10 + $0xe8] sm:$0xff]
        %v651 = vld [vmem:[#allocation10 + $0xf0] sm:$0xff]
        %v652 = vld [vmem:[#allocation10 + $0xf8] sm:$0xff]
        %v653 = vld [vmem:[#allocation10 + $0x100] sm:$0xff]
        %v654 = vld [vmem:[#allocation10 + $0x108] sm:$0xff]
        %v655 = vld [vmem:[#allocation10 + $0x110] sm:$0xff]
        %v656 = vld [vmem:[#allocation10 + $0x118] sm:$0xff]
        %v657 = vld [vmem:[#allocation10 + $0x120] sm:$0xff]
        %v658 = vld [vmem:[#allocation10 + $0x128] sm:$0xff]
        %v659 = vld [vmem:[#allocation10 + $0x130] sm:$0xff]
        %v660 = vld [vmem:[#allocation10 + $0x138] sm:$0xff]
        %v661 = vld [vmem:[#allocation10 + $0x140] sm:$0xff]
        %v662 = vld [vmem:[#allocation10 + $0x148] sm:$0xff]
        %v663 = vld [vmem:[#allocation10 + $0x150] sm:$0xff]
        %v664 = vld [vmem:[#allocation10 + $0x158] sm:$0xff]
        %v665 = vld [vmem:[#allocation10 + $0x160] sm:$0xff]
        %v666 = vld [vmem:[#allocation10 + $0x168] sm:$0xff]
        %v667 = vld [vmem:[#allocation10 + $0x170] sm:$0xff]
        %v668 = vld [vmem:[#allocation10 + $0x178] sm:$0xff]
        %v669 = vld [vmem:[#allocation10 + $0x180] sm:$0xff]
        %v670 = vld [vmem:[#allocation10 + $0x188] sm:$0xff]
        %v671 = vld [vmem:[#allocation10 + $0x190] sm:$0xff]
        %v672 = vld [vmem:[#allocation10 + $0x198] sm:$0xff]
        %v673 = vld [vmem:[#allocation10 + $0x1a0] sm:$0xff]
        %v674 = vld [vmem:[#allocation10 + $0x1a8] sm:$0xff]
        %v675 = vld [vmem:[#allocation10 + $0x1b0] sm:$0xff]
        %v676 = vld [vmem:[#allocation10 + $0x1b8] sm:$0xff]
        %v677 = vld [vmem:[#allocation10 + $0x1c0] sm:$0xff]
        %v678 = vld [vmem:[#allocation10 + $0x1c8] sm:$0xff]
        %v679 = vld [vmem:[#allocation10 + $0x1d0] sm:$0xff]
        %v680 = vld [vmem:[#allocation10 + $0x1d8] sm:$0xff]
        %v681 = vld [vmem:[#allocation10 + $0x1e0] sm:$0xff]
        %v682 = vld [vmem:[#allocation10 + $0x1e8] sm:$0xff]
        %v683 = vld [vmem:[#allocation10 + $0x1f0] sm:$0xff]
        %v684 = vld [vmem:[#allocation10 + $0x1f8] sm:$0xff]
        %685 = vmatprep.subr.mxu0 %v622
        %686 = vmatpush1.msra.mxu0 %v621
        %687 = vmatprep.subr.mxu0 %v624
        %688 = vmatpush1.msra.mxu0 %v623
        %689 = vmatprep.subr.mxu0 %v626
        %690 = vmatpush1.msra.mxu0 %v625
        %691 = vmatprep.subr.mxu0 %v628
        %692 = vmatpush1.msra.mxu0 %v627
        %693 = vmatprep.subr.mxu0 %v630
        %694 = vmatpush1.msra.mxu0 %v629
        %695 = vmatprep.subr.mxu0 %v632
        %696 = vmatpush1.msra.mxu0 %v631
        %697 = vmatprep.subr.mxu0 %v634
        %698 = vmatpush1.msra.mxu0 %v633
        %699 = vmatprep.subr.mxu0 %v636
        %700 = vmatpush1.msra.mxu0 %v635
        %701 = vmatprep.subr.mxu0 %v638
        %702 = vmatpush1.msra.mxu0 %v637
        %703 = vmatprep.subr.mxu0 %v640
        %704 = vmatpush1.msra.mxu0 %v639
        %705 = vmatprep.subr.mxu0 %v642
        %706 = vmatpush1.msra.mxu0 %v641
        %707 = vmatprep.subr.mxu0 %v644
        %708 = vmatpush1.msra.mxu0 %v643
        %709 = vmatprep.subr.mxu0 %v646
        %710 = vmatpush1.msra.mxu0 %v645
        %711 = vmatprep.subr.mxu0 %v648
        %712 = vmatpush1.msra.mxu0 %v647
        %713 = vmatprep.subr.mxu0 %v650
        %714 = vmatpush1.msra.mxu0 %v649
        %715 = vmatprep.subr.mxu0 %v652
        %716 = vmatpush1.msra.mxu0 %v651
        %717 = vmatprep.subr.mxu0 %v654
        %718 = vmatpush1.msra.mxu0 %v653
        %719 = vmatprep.subr.mxu0 %v656
        %720 = vmatpush1.msra.mxu0 %v655
        %721 = vmatprep.subr.mxu0 %v658
        %722 = vmatpush1.msra.mxu0 %v657
        %723 = vmatprep.subr.mxu0 %v660
        %724 = vmatpush1.msra.mxu0 %v659
        %725 = vmatprep.subr.mxu0 %v662
        %726 = vmatpush1.msra.mxu0 %v661
        %727 = vmatprep.subr.mxu0 %v664
        %728 = vmatpush1.msra.mxu0 %v663
        %729 = vmatprep.subr.mxu0 %v666
        %730 = vmatpush1.msra.mxu0 %v665
        %731 = vmatprep.subr.mxu0 %v668
        %732 = vmatpush1.msra.mxu0 %v667
        %733 = vmatprep.subr.mxu0 %v670
        %734 = vmatpush1.msra.mxu0 %v669
        %735 = vmatprep.subr.mxu0 %v672
        %736 = vmatpush1.msra.mxu0 %v671
        %737 = vmatprep.subr.mxu0 %v674
        %738 = vmatpush1.msra.mxu0 %v673
        %739 = vmatprep.subr.mxu0 %v676
        %740 = vmatpush1.msra.mxu0 %v675
        %741 = vmatprep.subr.mxu0 %v678
        %742 = vmatpush1.msra.mxu0 %v677
        %743 = vmatprep.subr.mxu0 %v680
        %744 = vmatpush1.msra.mxu0 %v679
        %745 = vmatprep.subr.mxu0 %v682
        %746 = vmatpush1.msra.mxu0 %v681
        %747 = vmatprep.subr.mxu0 %v684
        %748 = vmatpush1.msra.mxu0 %v683
        %749 = vmatprep.mubr.f32.mxu0 %v600
        %750 = vmatmul.mubr.f32.gmra.mrb[0].mxu0 %v599
        %v751 = vpop.f32.mrb[0].mxu0
        %v752 = vadd.f32 0.0, %v751
        %v753 = vpop.f32.mrb[0].mxu0
        %v754 = vadd.f32 0.0, %v753
        %755 = vmatprep.mubr.f32.mxu0 %v602
        %756 = vmatmul.mubr.f32.gmra.mrb[0].mxu0 %v601
        %v757 = vpop.f32.mrb[0].mxu0
        %v758 = vadd.f32 0.0, %v757
        %v759 = vpop.f32.mrb[0].mxu0
        %v760 = vadd.f32 0.0, %v759
        %761 = vdwg.mxu0
        %vm762 = vcmask 523264
        %v764 = vsel %vm762, %v597, 0
        %v767 = vsel %vm762, %v598, 0
        %769 = vmatprep.subr.mxu0 %v606
        %770 = vmatpush1.msra.mxu0 %v605
        %771 = vmatprep.subr.mxu0 %v608
        %772 = vmatpush1.msra.mxu0 %v607
        %773 = vmatprep.subr.mxu0 %v610
        %774 = vmatpush1.msra.mxu0 %v609
        %775 = vmatprep.subr.mxu0 %v612
        %776 = vmatpush1.msra.mxu0 %v611
        %777 = vmatprep.subr.mxu0 %v614
        %778 = vmatpush1.msra.mxu0 %v613
        %779 = vmatprep.subr.mxu0 %v616
        %780 = vmatpush1.msra.mxu0 %v615
        %781 = vmatprep.subr.mxu0 %v618
        %782 = vmatpush1.msra.mxu0 %v617
        %783 = vmatprep.subr.mxu0 %v620
        %784 = vmatpush1.msra.mxu0 %v619
        %785 = vmatprep.subr.mxu0 0.0
        %786 = vmatpush1.msra.mxu0 0.0
        %787 = vmatprep.subr.mxu0 0.0
        %788 = vmatpush1.msra.mxu0 0.0
        %789 = vmatprep.subr.mxu0 0.0
        %790 = vmatpush1.msra.mxu0 0.0
        %791 = vmatprep.subr.mxu0 0.0
        %792 = vmatpush1.msra.mxu0 0.0
        %793 = vmatprep.subr.mxu0 0.0
        %794 = vmatpush1.msra.mxu0 0.0
        %795 = vmatprep.subr.mxu0 0.0
        %796 = vmatpush1.msra.mxu0 0.0
        %797 = vmatprep.subr.mxu0 0.0
        %798 = vmatpush1.msra.mxu0 0.0
        %799 = vmatprep.subr.mxu0 0.0
        %800 = vmatpush1.msra.mxu0 0.0
        %801 = vmatprep.subr.mxu0 0.0
        %802 = vmatpush1.msra.mxu0 0.0
        %803 = vmatprep.subr.mxu0 0.0
        %804 = vmatpush1.msra.mxu0 0.0
        %805 = vmatprep.subr.mxu0 0.0
        %806 = vmatpush1.msra.mxu0 0.0
        %807 = vmatprep.subr.mxu0 0.0
        %808 = vmatpush1.msra.mxu0 0.0
        %809 = vmatprep.subr.mxu0 0.0
        %810 = vmatpush1.msra.mxu0 0.0
        %811 = vmatprep.subr.mxu0 0.0
        %812 = vmatpush1.msra.mxu0 0.0
        %813 = vmatprep.subr.mxu0 0.0
        %814 = vmatpush1.msra.mxu0 0.0
        %815 = vmatprep.subr.mxu0 0.0
        %816 = vmatpush1.msra.mxu0 0.0
        %817 = vmatprep.subr.mxu0 0.0
        %818 = vmatpush1.msra.mxu0 0.0
        %819 = vmatprep.subr.mxu0 0.0
        %820 = vmatpush1.msra.mxu0 0.0
        %821 = vmatprep.subr.mxu0 0.0
        %822 = vmatpush1.msra.mxu0 0.0
        %823 = vmatprep.subr.mxu0 0.0
        %824 = vmatpush1.msra.mxu0 0.0
        %825 = vmatprep.subr.mxu0 0.0
        %826 = vmatpush1.msra.mxu0 0.0
        %827 = vmatprep.subr.mxu0 0.0
        %828 = vmatpush1.msra.mxu0 0.0
        %829 = vmatprep.subr.mxu0 0.0
        %830 = vmatpush1.msra.mxu0 0.0
        %831 = vmatprep.subr.mxu0 0.0
        %832 = vmatpush1.msra.mxu0 0.0
        %833 = vmatprep.mubr.f32.mxu0 0.0
        %834 = vmatmul.mubr.f32.gmra.mrb[0].mxu0 %v764
        %v835 = vpop.f32.mrb[0].mxu0
        %v836 = vadd.f32 %v752, %v835
        %v837 = vpop.f32.mrb[0].mxu0
        %v838 = vadd.f32 %v754, %v837
        %839 = vmatprep.mubr.f32.mxu0 0.0
        %840 = vmatmul.mubr.f32.gmra.mrb[0].mxu0 %v767
        %v841 = vpop.f32.mrb[0].mxu0
        %v842 = vadd.f32 %v758, %v841
        %v843 = vpop.f32.mrb[0].mxu0
        %v844 = vadd.f32 %v760, %v843
        %845 = vdwg.mxu0
        %v846 = vld [vmem:[#allocation11] sm:$0xff]
        %v847 = vld [vmem:[#allocation11 + $0x8] sm:$0xff]
        %v848 = vld [vmem:[#allocation11 + $0x10] sm:$0xff]
        %v849 = vld [vmem:[#allocation11 + $0x18] sm:$0xff]
        %vm850 = vcmask 130048
        %v852 = vsel %vm850, %v603, 0
        %v855 = vsel %vm850, %v604, 0
        %857 = vmatprep.subr.mxu0 %v847
        %858 = vmatpush1.msra.mxu0 %v846
        %859 = vmatprep.subr.mxu0 %v849
        %860 = vmatpush1.msra.mxu0 %v848
        %861 = vmatprep.subr.mxu0 0.0
        %862 = vmatpush1.msra.mxu0 0.0
        %863 = vmatprep.subr.mxu0 0.0
        %864 = vmatpush1.msra.mxu0 0.0
        %865 = vmatprep.subr.mxu0 0.0
        %866 = vmatpush1.msra.mxu0 0.0
        %867 = vmatprep.subr.mxu0 0.0
        %868 = vmatpush1.msra.mxu0 0.0
        %869 = vmatprep.subr.mxu0 0.0
        %870 = vmatpush1.msra.mxu0 0.0
        %871 = vmatprep.subr.mxu0 0.0
        %872 = vmatpush1.msra.mxu0 0.0
        %873 = vmatprep.subr.mxu0 0.0
        %874 = vmatpush1.msra.mxu0 0.0
        %875 = vmatprep.subr.mxu0 0.0
        %876 = vmatpush1.msra.mxu0 0.0
        %877 = vmatprep.subr.mxu0 0.0
        %878 = vmatpush1.msra.mxu0 0.0
        %879 = vmatprep.subr.mxu0 0.0
        %880 = vmatpush1.msra.mxu0 0.0
        %881 = vmatprep.subr.mxu0 0.0
        %882 = vmatpush1.msra.mxu0 0.0
        %883 = vmatprep.subr.mxu0 0.0
        %884 = vmatpush1.msra.mxu0 0.0
        %885 = vmatprep.subr.mxu0 0.0
        %886 = vmatpush1.msra.mxu0 0.0
        %887 = vmatprep.subr.mxu0 0.0
        %888 = vmatpush1.msra.mxu0 0.0
        %889 = vmatprep.subr.mxu0 0.0
        %890 = vmatpush1.msra.mxu0 0.0
        %891 = vmatprep.subr.mxu0 0.0
        %892 = vmatpush1.msra.mxu0 0.0
        %893 = vmatprep.subr.mxu0 0.0
        %894 = vmatpush1.msra.mxu0 0.0
        %895 = vmatprep.subr.mxu0 0.0
        %896 = vmatpush1.msra.mxu0 0.0
        %897 = vmatprep.subr.mxu0 0.0
        %898 = vmatpush1.msra.mxu0 0.0
        %899 = vmatprep.subr.mxu0 0.0
        %900 = vmatpush1.msra.mxu0 0.0
        %901 = vmatprep.subr.mxu0 0.0
        %902 = vmatpush1.msra.mxu0 0.0
        %903 = vmatprep.subr.mxu0 0.0
        %904 = vmatpush1.msra.mxu0 0.0
        %905 = vmatprep.subr.mxu0 0.0
        %906 = vmatpush1.msra.mxu0 0.0
        %907 = vmatprep.subr.mxu0 0.0
        %908 = vmatpush1.msra.mxu0 0.0
        %909 = vmatprep.subr.mxu0 0.0
        %910 = vmatpush1.msra.mxu0 0.0
        %911 = vmatprep.subr.mxu0 0.0
        %912 = vmatpush1.msra.mxu0 0.0
        %913 = vmatprep.subr.mxu0 0.0
        %914 = vmatpush1.msra.mxu0 0.0
        %915 = vmatprep.subr.mxu0 0.0
        %916 = vmatpush1.msra.mxu0 0.0
        %917 = vmatprep.subr.mxu0 0.0
        %918 = vmatpush1.msra.mxu0 0.0
        %919 = vmatprep.subr.mxu0 0.0
        %920 = vmatpush1.msra.mxu0 0.0
        %921 = vmatprep.mubr.f32.mxu0 0.0
        %922 = vmatmul.mubr.f32.gmra.mrb[0].mxu0 %v852
        %v923 = vpop.f32.mrb[0].mxu0
        %v924 = vadd.f32 0.0, %v923
        %v925 = vpop.f32.mrb[0].mxu0
        %v926 = vadd.f32 0.0, %v925
        %927 = vmatprep.mubr.f32.mxu0 0.0
        %928 = vmatmul.mubr.f32.gmra.mrb[0].mxu0 %v855
        %v929 = vpop.f32.mrb[0].mxu0
        %v930 = vadd.f32 0.0, %v929
        %v931 = vpop.f32.mrb[0].mxu0
        %v932 = vadd.f32 0.0, %v931
        %933 = vdwg.mxu0
        %v934 = vadd.f32 %v836, %v924
        %v935 = vadd.f32 %v838, %v926
        %v936 = vadd.f32 %v842, %v930
        %v937 = vadd.f32 %v844, %v932
        %v938 = vld [vmem:[#allocation13] sm:$0x3]
        %v940 = vlaneseq
        %v941 = vshrl.u32 %v940, 7
        %v942 = vsub.s32 0, %v941
        %v943 = vrot.slane %v938, %v942
        %v944 = vlaneseq
        %v945 = vshrl.u32 %v944, 7
        %v946 = vsub.s32 1, %v945
        %v947 = vrot.slane %v938, %v946
        %v950 = vadd.f32 %v934, %v943
        %v951 = vadd.f32 %v935, %v947
        %v952 = vadd.f32 %v936, %v943
        %v953 = vadd.f32 %v937, %v947
        %v954 = vmax.f32 %v950, 0.0
        %v955 = vmax.f32 %v951, 0.0
        %v956 = vmax.f32 %v952, 0.0
        %v957 = vmax.f32 %v953, 0.0
        %v958 = vld [vmem:[#allocation14] sm:$0xff]
        %v959 = vld [vmem:[#allocation14 + $0x8] sm:$0xff]
        %v960 = vld [vmem:[#allocation14 + $0x10] sm:$0xff]
        %v961 = vld [vmem:[#allocation14 + $0x18] sm:$0xff]
        %v962 = vld [vmem:[#allocation14 + $0x20] sm:$0xff]
        %v963 = vld [vmem:[#allocation14 + $0x28] sm:$0xff]
        %v964 = vld [vmem:[#allocation14 + $0x30] sm:$0xff]
        %v965 = vld [vmem:[#allocation14 + $0x38] sm:$0xff]
        %v966 = vld [vmem:[#allocation14 + $0x40] sm:$0xff]
        %v967 = vld [vmem:[#allocation14 + $0x48] sm:$0xff]
        %v968 = vld [vmem:[#allocation14 + $0x50] sm:$0xff]
        %v969 = vld [vmem:[#allocation14 + $0x58] sm:$0xff]
        %v970 = vld [vmem:[#allocation14 + $0x60] sm:$0xff]
        %v971 = vld [vmem:[#allocation14 + $0x68] sm:$0xff]
        %v972 = vld [vmem:[#allocation14 + $0x70] sm:$0xff]
        %v973 = vld [vmem:[#allocation14 + $0x78] sm:$0xff]
        %v974 = vld [vmem:[#allocation14 + $0x80] sm:$0xff]
        %v975 = vld [vmem:[#allocation14 + $0x88] sm:$0xff]
        %v976 = vld [vmem:[#allocation14 + $0x90] sm:$0xff]
        %v977 = vld [vmem:[#allocation14 + $0x98] sm:$0xff]
        %v978 = vld [vmem:[#allocation14 + $0xa0] sm:$0xff]
        %v979 = vld [vmem:[#allocation14 + $0xa8] sm:$0xff]
        %v980 = vld [vmem:[#allocation14 + $0xb0] sm:$0xff]
        %v981 = vld [vmem:[#allocation14 + $0xb8] sm:$0xff]
        %v982 = vld [vmem:[#allocation14 + $0xc0] sm:$0xff]
        %v983 = vld [vmem:[#allocation14 + $0xc8] sm:$0xff]
        %v984 = vld [vmem:[#allocation14 + $0xd0] sm:$0xff]
        %v985 = vld [vmem:[#allocation14 + $0xd8] sm:$0xff]
        %v986 = vld [vmem:[#allocation14 + $0xe0] sm:$0xff]
        %v987 = vld [vmem:[#allocation14 + $0xe8] sm:$0xff]
        %v988 = vld [vmem:[#allocation14 + $0xf0] sm:$0xff]
        %v989 = vld [vmem:[#allocation14 + $0xf8] sm:$0xff]
        %v990 = vld [vmem:[#allocation14 + $0x100] sm:$0xff]
        %v991 = vld [vmem:[#allocation14 + $0x108] sm:$0xff]
        %v992 = vld [vmem:[#allocation14 + $0x110] sm:$0xff]
        %v993 = vld [vmem:[#allocation14 + $0x118] sm:$0xff]
        %v994 = vld [vmem:[#allocation14 + $0x120] sm:$0xff]
        %v995 = vld [vmem:[#allocation14 + $0x128] sm:$0xff]
        %v996 = vld [vmem:[#allocation14 + $0x130] sm:$0xff]
        %v997 = vld [vmem:[#allocation14 + $0x138] sm:$0xff]
        %v998 = vld [vmem:[#allocation14 + $0x140] sm:$0xff]
        %v999 = vld [vmem:[#allocation14 + $0x148] sm:$0xff]
        %v1000 = vld [vmem:[#allocation14 + $0x150] sm:$0xff]
        %v1001 = vld [vmem:[#allocation14 + $0x158] sm:$0xff]
        %v1002 = vld [vmem:[#allocation14 + $0x160] sm:$0xff]
        %v1003 = vld [vmem:[#allocation14 + $0x168] sm:$0xff]
        %v1004 = vld [vmem:[#allocation14 + $0x170] sm:$0xff]
        %v1005 = vld [vmem:[#allocation14 + $0x178] sm:$0xff]
        %v1006 = vld [vmem:[#allocation14 + $0x180] sm:$0xff]
        %v1007 = vld [vmem:[#allocation14 + $0x188] sm:$0xff]
        %v1008 = vld [vmem:[#allocation14 + $0x190] sm:$0xff]
        %v1009 = vld [vmem:[#allocation14 + $0x198] sm:$0xff]
        %v1010 = vld [vmem:[#allocation14 + $0x1a0] sm:$0xff]
        %v1011 = vld [vmem:[#allocation14 + $0x1a8] sm:$0xff]
        %v1012 = vld [vmem:[#allocation14 + $0x1b0] sm:$0xff]
        %v1013 = vld [vmem:[#allocation14 + $0x1b8] sm:$0xff]
        %v1014 = vld [vmem:[#allocation14 + $0x1c0] sm:$0xff]
        %v1015 = vld [vmem:[#allocation14 + $0x1c8] sm:$0xff]
        %v1016 = vld [vmem:[#allocation14 + $0x1d0] sm:$0xff]
        %v1017 = vld [vmem:[#allocation14 + $0x1d8] sm:$0xff]
        %v1018 = vld [vmem:[#allocation14 + $0x1e0] sm:$0xff]
        %v1019 = vld [vmem:[#allocation14 + $0x1e8] sm:$0xff]
        %v1020 = vld [vmem:[#allocation14 + $0x1f0] sm:$0xff]
        %v1021 = vld [vmem:[#allocation14 + $0x1f8] sm:$0xff]
        %v1022 = vld [vmem:[#allocation16] sm:$0x3]
        %v1024 = vlaneseq
        %v1025 = vshrl.u32 %v1024, 7
        %v1026 = vsub.s32 0, %v1025
        %v1027 = vrot.slane %v1022, %v1026
        %v1028 = vlaneseq
        %v1029 = vshrl.u32 %v1028, 7
        %v1030 = vsub.s32 1, %v1029
        %v1031 = vrot.slane %v1022, %v1030
        %1034 = vmatprep.subr.mxu0 %v959
        %1035 = vmatpush1.msra.mxu0 %v958
        %1036 = vmatprep.subr.mxu0 %v961
        %1037 = vmatpush1.msra.mxu0 %v960
        %1038 = vmatprep.subr.mxu0 %v963
        %1039 = vmatpush1.msra.mxu0 %v962
        %1040 = vmatprep.subr.mxu0 %v965
        %1041 = vmatpush1.msra.mxu0 %v964
        %1042 = vmatprep.subr.mxu0 %v967
        %1043 = vmatpush1.msra.mxu0 %v966
        %1044 = vmatprep.subr.mxu0 %v969
        %1045 = vmatpush1.msra.mxu0 %v968
        %1046 = vmatprep.subr.mxu0 %v971
        %1047 = vmatpush1.msra.mxu0 %v970
        %1048 = vmatprep.subr.mxu0 %v973
        %1049 = vmatpush1.msra.mxu0 %v972
        %1050 = vmatprep.subr.mxu0 %v975
        %1051 = vmatpush1.msra.mxu0 %v974
        %1052 = vmatprep.subr.mxu0 %v977
        %1053 = vmatpush1.msra.mxu0 %v976
        %1054 = vmatprep.subr.mxu0 %v979
        %1055 = vmatpush1.msra.mxu0 %v978
        %1056 = vmatprep.subr.mxu0 %v981
        %1057 = vmatpush1.msra.mxu0 %v980
        %1058 = vmatprep.subr.mxu0 %v983
        %1059 = vmatpush1.msra.mxu0 %v982
        %1060 = vmatprep.subr.mxu0 %v985
        %1061 = vmatpush1.msra.mxu0 %v984
        %1062 = vmatprep.subr.mxu0 %v987
        %1063 = vmatpush1.msra.mxu0 %v986
        %1064 = vmatprep.subr.mxu0 %v989
        %1065 = vmatpush1.msra.mxu0 %v988
        %1066 = vmatprep.subr.mxu0 %v991
        %1067 = vmatpush1.msra.mxu0 %v990
        %1068 = vmatprep.subr.mxu0 %v993
        %1069 = vmatpush1.msra.mxu0 %v992
        %1070 = vmatprep.subr.mxu0 %v995
        %1071 = vmatpush1.msra.mxu0 %v994
        %1072 = vmatprep.subr.mxu0 %v997
        %1073 = vmatpush1.msra.mxu0 %v996
        %1074 = vmatprep.subr.mxu0 %v999
        %1075 = vmatpush1.msra.mxu0 %v998
        %1076 = vmatprep.subr.mxu0 %v1001
        %1077 = vmatpush1.msra.mxu0 %v1000
        %1078 = vmatprep.subr.mxu0 %v1003
        %1079 = vmatpush1.msra.mxu0 %v1002
        %1080 = vmatprep.subr.mxu0 %v1005
        %1081 = vmatpush1.msra.mxu0 %v1004
        %1082 = vmatprep.subr.mxu0 %v1007
        %1083 = vmatpush1.msra.mxu0 %v1006
        %1084 = vmatprep.subr.mxu0 %v1009
        %1085 = vmatpush1.msra.mxu0 %v1008
        %1086 = vmatprep.subr.mxu0 %v1011
        %1087 = vmatpush1.msra.mxu0 %v1010
        %1088 = vmatprep.subr.mxu0 %v1013
        %1089 = vmatpush1.msra.mxu0 %v1012
        %1090 = vmatprep.subr.mxu0 %v1015
        %1091 = vmatpush1.msra.mxu0 %v1014
        %1092 = vmatprep.subr.mxu0 %v1017
        %1093 = vmatpush1.msra.mxu0 %v1016
        %1094 = vmatprep.subr.mxu0 %v1019
        %1095 = vmatpush1.msra.mxu0 %v1018
        %1096 = vmatprep.subr.mxu0 %v1021
        %1097 = vmatpush1.msra.mxu0 %v1020
        %1098 = vmatprep.mubr.f32.mxu0 %v955
        %1099 = vmatmul.mubr.f32.gmra.mrb[0].mxu0 %v954
        %v1100 = vpop.f32.mrb[0].mxu0
        %v1101 = vadd.f32 %v1027, %v1100
        %v1102 = vpop.f32.mrb[0].mxu0
        %v1103 = vadd.f32 %v1031, %v1102
        %1104 = vmatprep.mubr.f32.mxu0 %v957
        %1105 = vmatmul.mubr.f32.gmra.mrb[0].mxu0 %v956
        %v1106 = vpop.f32.mrb[0].mxu0
        %v1107 = vadd.f32 %v1027, %v1106
        %v1108 = vpop.f32.mrb[0].mxu0
        %v1109 = vadd.f32 %v1031, %v1108
        %1110 = vdwg.mxu0
        %v1111 = vmax.f32 %v1101, 0.0
        %v1112 = vmax.f32 %v1103, 0.0
        %v1113 = vmax.f32 %v1107, 0.0
        %v1114 = vmax.f32 %v1109, 0.0
        %v1115 = vld [vmem:[#allocation17] sm:$0xff]
        %v1116 = vld [vmem:[#allocation17 + $0x8] sm:$0xff]
        %v1117 = vld [vmem:[#allocation17 + $0x10] sm:$0xff]
        %v1118 = vld [vmem:[#allocation17 + $0x18] sm:$0xff]
        %v1119 = vld [vmem:[#allocation17 + $0x20] sm:$0xff]
        %v1120 = vld [vmem:[#allocation17 + $0x28] sm:$0xff]
        %v1121 = vld [vmem:[#allocation17 + $0x30] sm:$0xff]
        %v1122 = vld [vmem:[#allocation17 + $0x38] sm:$0xff]
        %v1123 = vld [vmem:[#allocation17 + $0x40] sm:$0xff]
        %v1124 = vld [vmem:[#allocation17 + $0x48] sm:$0xff]
        %v1125 = vld [vmem:[#allocation17 + $0x50] sm:$0xff]
        %v1126 = vld [vmem:[#allocation17 + $0x58] sm:$0xff]
        %v1127 = vld [vmem:[#allocation17 + $0x60] sm:$0xff]
        %v1128 = vld [vmem:[#allocation17 + $0x68] sm:$0xff]
        %v1129 = vld [vmem:[#allocation17 + $0x70] sm:$0xff]
        %v1130 = vld [vmem:[#allocation17 + $0x78] sm:$0xff]
        %v1131 = vld [vmem:[#allocation17 + $0x80] sm:$0xff]
        %v1132 = vld [vmem:[#allocation17 + $0x88] sm:$0xff]
        %v1133 = vld [vmem:[#allocation17 + $0x90] sm:$0xff]
        %v1134 = vld [vmem:[#allocation17 + $0x98] sm:$0xff]
        %v1135 = vld [vmem:[#allocation17 + $0xa0] sm:$0xff]
        %v1136 = vld [vmem:[#allocation17 + $0xa8] sm:$0xff]
        %v1137 = vld [vmem:[#allocation17 + $0xb0] sm:$0xff]
        %v1138 = vld [vmem:[#allocation17 + $0xb8] sm:$0xff]
        %v1139 = vld [vmem:[#allocation17 + $0xc0] sm:$0xff]
        %v1140 = vld [vmem:[#allocation17 + $0xc8] sm:$0xff]
        %v1141 = vld [vmem:[#allocation17 + $0xd0] sm:$0xff]
        %v1142 = vld [vmem:[#allocation17 + $0xd8] sm:$0xff]
        %v1143 = vld [vmem:[#allocation17 + $0xe0] sm:$0xff]
        %v1144 = vld [vmem:[#allocation17 + $0xe8] sm:$0xff]
        %v1145 = vld [vmem:[#allocation17 + $0xf0] sm:$0xff]
        %v1146 = vld [vmem:[#allocation17 + $0xf8] sm:$0xff]
        %v1147 = vld [vmem:[#allocation19] sm:$0x1]
        %v1149 = vlaneseq
        %v1150 = vshrl.u32 %v1149, 7
        %v1151 = vsub.s32 0, %v1150
        %v1152 = vrot.slane %v1147, %v1151
        %1154 = vmatprep.subr.mxu0 0.0
        %1155 = vmatpush1.msra.mxu0 %v1115
        %1156 = vmatprep.subr.mxu0 0.0
        %1157 = vmatpush1.msra.mxu0 %v1116
        %1158 = vmatprep.subr.mxu0 0.0
        %1159 = vmatpush1.msra.mxu0 %v1117
        %1160 = vmatprep.subr.mxu0 0.0
        %1161 = vmatpush1.msra.mxu0 %v1118
        %1162 = vmatprep.subr.mxu0 0.0
        %1163 = vmatpush1.msra.mxu0 %v1119
        %1164 = vmatprep.subr.mxu0 0.0
        %1165 = vmatpush1.msra.mxu0 %v1120
        %1166 = vmatprep.subr.mxu0 0.0
        %1167 = vmatpush1.msra.mxu0 %v1121
        %1168 = vmatprep.subr.mxu0 0.0
        %1169 = vmatpush1.msra.mxu0 %v1122
        %1170 = vmatprep.subr.mxu0 0.0
        %1171 = vmatpush1.msra.mxu0 %v1123
        %1172 = vmatprep.subr.mxu0 0.0
        %1173 = vmatpush1.msra.mxu0 %v1124
        %1174 = vmatprep.subr.mxu0 0.0
        %1175 = vmatpush1.msra.mxu0 %v1125
        %1176 = vmatprep.subr.mxu0 0.0
        %1177 = vmatpush1.msra.mxu0 %v1126
        %1178 = vmatprep.subr.mxu0 0.0
        %1179 = vmatpush1.msra.mxu0 %v1127
        %1180 = vmatprep.subr.mxu0 0.0
        %1181 = vmatpush1.msra.mxu0 %v1128
        %1182 = vmatprep.subr.mxu0 0.0
        %1183 = vmatpush1.msra.mxu0 %v1129
        %1184 = vmatprep.subr.mxu0 0.0
        %1185 = vmatpush1.msra.mxu0 %v1130
        %1186 = vmatprep.subr.mxu0 0.0
        %1187 = vmatpush1.msra.mxu0 %v1131
        %1188 = vmatprep.subr.mxu0 0.0
        %1189 = vmatpush1.msra.mxu0 %v1132
        %1190 = vmatprep.subr.mxu0 0.0
        %1191 = vmatpush1.msra.mxu0 %v1133
        %1192 = vmatprep.subr.mxu0 0.0
        %1193 = vmatpush1.msra.mxu0 %v1134
        %1194 = vmatprep.subr.mxu0 0.0
        %1195 = vmatpush1.msra.mxu0 %v1135
        %1196 = vmatprep.subr.mxu0 0.0
        %1197 = vmatpush1.msra.mxu0 %v1136
        %1198 = vmatprep.subr.mxu0 0.0
        %1199 = vmatpush1.msra.mxu0 %v1137
        %1200 = vmatprep.subr.mxu0 0.0
        %1201 = vmatpush1.msra.mxu0 %v1138
        %1202 = vmatprep.subr.mxu0 0.0
        %1203 = vmatpush1.msra.mxu0 %v1139
        %1204 = vmatprep.subr.mxu0 0.0
        %1205 = vmatpush1.msra.mxu0 %v1140
        %1206 = vmatprep.subr.mxu0 0.0
        %1207 = vmatpush1.msra.mxu0 %v1141
        %1208 = vmatprep.subr.mxu0 0.0
        %1209 = vmatpush1.msra.mxu0 %v1142
        %1210 = vmatprep.subr.mxu0 0.0
        %1211 = vmatpush1.msra.mxu0 %v1143
        %1212 = vmatprep.subr.mxu0 0.0
        %1213 = vmatpush1.msra.mxu0 %v1144
        %1214 = vmatprep.subr.mxu0 0.0
        %1215 = vmatpush1.msra.mxu0 %v1145
        %1216 = vmatprep.subr.mxu0 0.0
        %1217 = vmatpush1.msra.mxu0 %v1146
        %1218 = vmatprep.mubr.f32.mxu0 %v1112
        %1219 = vmatmul.mubr.f32.gmra.mrb[0].mxu0 %v1111
        %v1220 = vpop.f32.mrb[0].mxu0
        %v1221 = vadd.f32 %v1152, %v1220
        %v1222 = vpop.f32.mrb[0].mxu0
        %1223 = vmatprep.mubr.f32.mxu0 %v1114
        %1224 = vmatmul.mubr.f32.gmra.mrb[0].mxu0 %v1113
        %v1225 = vpop.f32.mrb[0].mxu0
        %v1226 = vadd.f32 %v1152, %v1225
        %v1227 = vpop.f32.mrb[0].mxu0
        %1228 = vdwg.mxu0
        %1229 = vst [vmem:[%s592] sm:$0xff] %v1221
        %1230 = vst [vmem:[%s592 + $0x8] sm:$0xff] %v1226
        %s1231 = sand.u32 %s289, 1
        %s1232 = scalar_lea.sflag [#allocation4], %s1231
        %s1233 = sand.u32 %s289, 1
        %s1234 = smul.addr %s1233, 16
        %s1235 = scalar_lea.vmem [#allocation20], %s1234
        // Predicated region
        $region109: #{tpu_custom_call.1} parent=63 // pred_check
          %p1236 = pneg %p299
        $region110: #{tpu_custom_call.1} parent=63 // pred_check_branch
          %1238 = sbr.rel (%p1236) target = $region112
        $region111: #{tpu_custom_call.1} parent=63 // pred_region
          %s1239 = smul.u32 2, %s35
          %s1241 = ssub.s32 256, 256
          %1242 = vsyncadd %s1232, %s1241
          %s1243 = smul.addr %s1239, 128
          %s1244 = scalar_lea.hbm %s11, %s1243
          %s1245 = sshll.u32 %s1235, 4
          %s1246 = int_to_ptr.vmem [resolvable:$true] %s1245
          %1251 = dma.vmem_to_hbm [thread:$0]  %s1246, 256, %s1244, %s1232, 128, 128, 8
        $region112: #{tpu_custom_call.1} parent=63 // pred_fallthru
          _
      $region64: #{tpu_custom_call.1} parent=5 // pred_fallthru
        _
      %p1252 = scmp.le.s32.totalorder 2, %s30
      // Predicated region
      $region113: #{tpu_custom_call.1} parent=5 // pred_check
        %p1253 = pneg %p1252
      $region114: #{tpu_custom_call.1} parent=5 // pred_check_branch
        %1255 = sbr.rel (%p1253) target = $region116
      $region115: #{tpu_custom_call.1} parent=5 // pred_region
        %s1256 = ssub.s32 %s30, 2
        // Predicated region
        $region117: #{tpu_custom_call.1} parent=115 // pred_check
          %p1257 = pneg %p305
        $region118: #{tpu_custom_call.1} parent=115 // pred_check_branch
          %1259 = sbr.rel (%p1257) target = $region120
        $region119: #{tpu_custom_call.1} parent=115 // pred_region
          %s1260 = sand.u32 %s290, 1
          %s1261 = scalar_lea.sflag [#allocation4], %s1260
          %s1262 = sand.u32 %s290, 1
          %s1263 = smul.addr %s1262, 16
          %s1264 = scalar_lea.vmem [#allocation20], %s1263
          %1265 = dma.done %s1261, 256
        $region120: #{tpu_custom_call.1} parent=115 // pred_fallthru
          _
      $region116: #{tpu_custom_call.1} parent=5 // pred_fallthru
        _
    $region6: #{tpu_custom_call.1} parent=1 // loop_footer
      %s34 = sadd.s32 1, %s30
    $region7: #{tpu_custom_call.1} parent=1 // loop_footer_branch
      %29 = sbr.rel target = $region3
    $region8: #{tpu_custom_call.1} parent=1 // loop_exit
      _
    %1266 = vsyncpa [#allocation3], 1
    %s1267 = scalar_lea.sflag [#allocation3], 1
    %1268 = vsyncpa %s1267, 1
    %1269 = vsyncpa [#allocation6], 1
    %s1270 = scalar_lea.sflag [#allocation6], 1
    %1271 = vsyncpa %s1270, 1
    %1272 = vsyncpa [#allocation9], 1
    %1273 = vsyncpa [#allocation12], 1
    %1274 = vsyncpa [#allocation15], 1
    %1275 = vsyncpa [#allocation18], 1
    %1276 = vsyncpa [#allocation4], 1
    %s1277 = scalar_lea.sflag [#allocation4], 1
    %1278 = vsyncpa %s1277, 1

</llo_original>
